<compile_context>
chip_gen: v7x
topology: tpu7x:2x2x1
jax: 0.10.0
libtpu: 0.0.40
codegen_flags: <defaults>
</compile_context>

<pallas_src>
import math

import jax
import jax.numpy as jnp
import numpy as np
from jax import lax
from jax.experimental import pallas as pl
from jax.experimental.pallas import tpu as pltpu

H_FC1 = 20    # fc1 output width
H_LSTM = 50   # fc2 output width / LSTM hidden width
LANE = 128    # TPU vreg lane width; every feature axis is zero-padded to this
NGATE = 4     # LSTM gates, PyTorch order: i, f, g, o


def _round8(n):
    return ((n + 7) // 8) * 8


def critic_kernel(x_ref, a_ref, wmlp_ref, wg_ref, ws_ref, out_ref):
    """One whole forward per grid step, fully VMEM-resident (<1 MiB).

    Padded lanes are mathematically inert: relu keeps the zero-padded lanes of
    h1/h2 at zero (except h2 lane 127, which is deliberately 1.0 to carry the
    fused LSTM bias), and the padded gate pre-activations are exactly 0, so
    sigmoid gives 0.5 and tanh gives 0 there; since c starts at 0, the padded
    lanes of c and h remain 0 through every step (0.5*0 + 0.5*0 = 0).
    """
    x = x_ref[0]                      # (B, S)
    a = a_ref[0]                      # (B, A)
    B, S = x.shape
    A = a.shape[1]
    S8 = _round8(S)

    # Small operands: one vreg, sliced for free.
    b1 = ws_ref[0:1, :]               # (1, 128)
    b2 = ws_ref[1:2, :]               # (1, 128); lane 127 holds the constant 1.0
    w3 = ws_ref[2:3, :]               # (1, 128) fc3 weight row
    b3 = ws_ref[3:4, 0:1]             # (1, 1)   fc3 bias

    # MLP weights: sublane-aligned segments of one packed buffer.
    w1 = wmlp_ref[0:S, :]                              # (S, 128)
    w2h = wmlp_ref[S8:S8 + LANE, :]                    # (128, 128)
    w2a = wmlp_ref[S8 + LANE:S8 + LANE + A, :]         # (A, 128)

    # fc1 + relu
    h1 = jnp.maximum(
        jnp.dot(x, w1, preferred_element_type=jnp.float32) + b1, 0.0)

    # fc2(cat([h1, a], 1)) + relu, the concat expressed as a sum of two matmuls.
    # b2's lane 127 is 1.0 and all weight columns at lane 127 are zero, so
    # h2[:, 127] == relu(1.0) == 1.0 — used below to fold the LSTM bias.
    h2 = jnp.maximum(
        jnp.dot(h1, w2h, preferred_element_type=jnp.float32)
        + jnp.dot(a, w2a, preferred_element_type=jnp.float32)
        + b2, 0.0)                                      # (B, 128)

    # Hoisted input->hidden projection for ALL timesteps.  Row 127 of the
    # packed wih holds (b_ih + b_hh), so the bias add is part of the matmul.
    gates_x = jnp.dot(h2, wg_ref[:, 0:NGATE * LANE],
                      preferred_element_type=jnp.float32)   # (B, 4*128)

    # Recurrent weight hoisted out of the serial loop (review item 1).
    whh = wg_ref[:, NGATE * LANE:2 * NGATE * LANE]           # (128, 4*128)

    # The original module feeds a (B, 1, 50) tensor to a batch_first=False
    # LSTM, i.e. seq_len = B with batch = 1 -> serial recurrence over rows.
    h = jnp.zeros((1, LANE), jnp.float32)
    c = jnp.zeros((1, LANE), jnp.float32)
    hs = []
    for t in range(B):   # B is tiny & static: full unroll
        g = gates_x[t:t + 1, :] + jnp.dot(h, whh,
                                          preferred_element_type=jnp.float32)
        gi = jax.nn.sigmoid(g[:, 0 * LANE:1 * LANE])
        gf = jax.nn.sigmoid(g[:, 1 * LANE:2 * LANE])
        gg = jnp.tanh(g[:, 2 * LANE:3 * LANE])
        go = jax.nn.sigmoid(g[:, 3 * LANE:4 * LANE])
        c = gf * c + gi * gg
        h = go * jnp.tanh(c)
        hs.append(h)
    lstm_h = jnp.concatenate(hs, axis=0)                     # (B, 128)

    # fc3 with N=1: broadcast-multiply + lane reduction (VPU/XLU), no MXU pass.
    out_ref[0] = jnp.sum(lstm_h * w3, axis=-1, keepdims=True) + b3


def prepare_params(params):
    """One-time packing of all weights into 3 lane-aligned buffers."""
    (w1, b1, w2, b2, w_ih, w_hh, b_ih, b_hh, w3, b3) = params
    H = H_LSTM
    S = w1.shape[1]
    A = w2.shape[1] - H_FC1
    S8, A8 = _round8(S), _round8(A)

    # MLP weights stacked row-wise: [w1.T | w2_h.T | w2_a.T], each segment
    # starting at a sublane-aligned (multiple-of-8) row offset.
    wmlp = jnp.zeros((S8 + LANE + A8, LANE), jnp.float32)
    wmlp = wmlp.at[0:S, 0:H_FC1].set(w1.T)
    wmlp = wmlp.at[S8:S8 + H_FC1, 0:H].set(w2[:, :H_FC1].T)
    wmlp = wmlp.at[S8 + LANE:S8 + LANE + A, 0:H].set(w2[:, H_FC1:].T)

    # LSTM weights fused: lanes [0, 512) = input->hidden (with fused bias in
    # row 127), lanes [512, 1024) = hidden->hidden.  Each gate owns a 128-lane
    # slot, PyTorch gate order i, f, g, o.
    wg = jnp.zeros((LANE, 2 * NGATE * LANE), jnp.float32)
    for k in range(NGATE):
        wg = wg.at[0:H, k * LANE:k * LANE + H].set(w_ih[k * H:(k + 1) * H, :].T)
        wg = wg.at[LANE - 1, k * LANE:k * LANE + H].set(
            b_ih[k * H:(k + 1) * H] + b_hh[k * H:(k + 1) * H])
        wg = wg.at[0:H, (NGATE + k) * LANE:(NGATE + k) * LANE + H].set(
            w_hh[k * H:(k + 1) * H, :].T)

    # Small operands: one (8, 128) buffer (a single vreg worth of data).
    ws = jnp.zeros((8, LANE), jnp.float32)
    ws = ws.at[0, 0:H_FC1].set(b1)
    ws = ws.at[1, 0:H].set(b2)
    ws = ws.at[1, LANE - 1].set(1.0)      # constant-1 lane -> folds LSTM bias
    ws = ws.at[2, 0:H].set(w3[0])
    ws = ws.at[3, 0].set(b3[0])

    return (wmlp, wg, ws)


@jax.jit
def _critic_pallas(x3, a3, wmlp, wg, ws):
    """Gridded pallas_call: leading axis R = independent forward evaluations."""
    R, B, S = x3.shape
    A = a3.shape[2]
    return pl.pallas_call(
        critic_kernel,
        out_shape=jax.ShapeDtypeStruct((R, B, 1), jnp.float32),
        grid_spec=pltpu.PrefetchScalarGridSpec(
            num_scalar_prefetch=0,
            grid=(R,),
            in_specs=[
                pl.BlockSpec((1, B, S), lambda i: (i, 0, 0)),
                pl.BlockSpec((1, B, A), lambda i: (i, 0, 0)),
                # Constant index_maps: weights DMA'd once, VMEM-resident
                # across the whole grid.
                pl.BlockSpec(wmlp.shape, lambda i: (0, 0)),
                pl.BlockSpec(wg.shape, lambda i: (0, 0)),
                pl.BlockSpec(ws.shape, lambda i: (0, 0)),
            ],
            out_specs=pl.BlockSpec((1, B, 1), lambda i: (i, 0, 0)),
        ),
        compiler_params=pltpu.CompilerParams(
            dimension_semantics=("parallel",)),
    )(x3, a3, wmlp, wg, ws)


def critic_forward(packed, x, a):
    """Module-faithful single forward: x (B, S), a (B, A) -> (B, 1)."""
    wmlp, wg, ws = packed
    return _critic_pallas(x[None], a[None], wmlp, wg, ws)[0]


def critic_forward_many(packed, xs, actions):
    """Throughput path: xs (R, B, S), actions (R, B, A) -> (R, B, 1)."""
    wmlp, wg, ws = packed
    return _critic_pallas(xs, actions, wmlp, wg, ws)


def critic_ref(params, x, a):
    """Pure-JAX reference matching the PyTorch forward semantics."""
    (w1, b1, w2, b2, w_ih, w_hh, b_ih, b_hh, w3, b3) = params
    H = H_LSTM
    h1 = jax.nn.relu(x @ w1.T + b1)
    h2 = jax.nn.relu(jnp.concatenate([h1, a], axis=1) @ w2.T + b2)

    def step(carry, x_t):
        h, c = carry
        gates = x_t @ w_ih.T + b_ih + h @ w_hh.T + b_hh
        i = jax.nn.sigmoid(gates[0:H])
        f = jax.nn.sigmoid(gates[H:2 * H])
        g = jnp.tanh(gates[2 * H:3 * H])
        o = jax.nn.sigmoid(gates[3 * H:4 * H])
        c = f * c + i * g
        h = o * jnp.tanh(c)
        return (h, c), h

    (_, _), hs = lax.scan(step, (jnp.zeros(H), jnp.zeros(H)), h2)
    return hs @ w3.T + b3


def init_params(key, nb_states, nb_actions, init_w=0.003):
    """Deterministic synthetic init mirroring the module's __init__ shapes."""
    ks = jax.random.split(key, 10)

    def u(k, shape, bound):
        return jax.random.uniform(k, shape, jnp.float32, -bound, bound)

    H = H_LSTM
    # fanin_init quirk replicated: fanin = size[0] (= out_features)
    w1 = u(ks[0], (H_FC1, nb_states), 1.0 / math.sqrt(H_FC1))
    b1 = u(ks[1], (H_FC1,), 1.0 / math.sqrt(nb_states))
    w2 = u(ks[2], (H, H_FC1 + nb_actions), 1.0 / math.sqrt(H))
    b2 = u(ks[3], (H,), 1.0 / math.sqrt(H_FC1 + nb_actions))
    lb = 1.0 / math.sqrt(H)
    w_ih = u(ks[4], (4 * H, H), lb)
    w_hh = u(ks[5], (4 * H, H), lb)
    b_ih = u(ks[6], (4 * H,), lb)
    b_hh = u(ks[7], (4 * H,), lb)
    w3 = u(ks[8], (1, H), init_w)
    b3 = u(ks[9], (1,), 1.0 / math.sqrt(H))
    return (w1, b1, w2, b2, w_ih, w_hh, b_ih, b_hh, w3, b3)


if __name__ == "__main__":
    B, NB_STATES, NB_ACTIONS = 4, 32, 8

    key = jax.random.PRNGKey(0)
    kp, kx, ka, kr = jax.random.split(key, 4)
    params = init_params(kp, NB_STATES, NB_ACTIONS)
    x = jax.random.normal(kx, (B, NB_STATES), jnp.float32)
    a = jax.random.normal(ka, (B, NB_ACTIONS), jnp.float32)

    packed = jax.tree.map(jax.block_until_ready, prepare_params(params))

    # Single forward (matches the PyTorch module exactly).
    out = jax.block_until_ready(critic_forward(packed, x, a))
    ref = jax.block_until_ready(critic_ref(params, x, a))
    np.testing.assert_allclose(np.asarray(out), np.asarray(ref),
                               rtol=1e-4, atol=1e-4)
    assert out.shape == (B, 1)

    # Batched-requests path: grid over R, weights fetched once, axis parallel.
    R = 6
    xs = jax.random.normal(kr, (R, B, NB_STATES), jnp.float32)
    acts = jax.random.normal(jax.random.fold_in(kr, 1),
                             (R, B, NB_ACTIONS), jnp.float32)
    outs = jax.block_until_ready(critic_forward_many(packed, xs, acts))
    refs = jax.vmap(lambda xx, aa: critic_ref(params, xx, aa))(xs, acts)
    np.testing.assert_allclose(np.asarray(outs), np.asarray(refs),
                               rtol=1e-4, atol=1e-4)
    assert outs.shape == (R, B, 1)

    print("KERNEL_OK")
</pallas_src>

<mosaic_0001>
module attributes {stable_mosaic.version = 11 : i64} {
  func.func @critic_kernel(%arg0: i32, %arg1: memref<1x4x32xf32, #tpu.memory_space<vmem>>, %arg2: memref<1x4x8xf32, #tpu.memory_space<vmem>>, %arg3: memref<168x128xf32, #tpu.memory_space<vmem>>, %arg4: memref<128x1024xf32, #tpu.memory_space<vmem>>, %arg5: memref<8x128xf32, #tpu.memory_space<vmem>>, %arg6: memref<1x4x1xf32, #tpu.memory_space<vmem>>) attributes {dimension_semantics = [#tpu.dimension_semantics<parallel>], iteration_bounds = array<i64: 1>, scalar_prefetch = 0 : i64, scratch_operands = 0 : i64, tpu.core_type = #tpu.core_type<tc>, window_params = [{transform_indices = @transform_0, window_bounds = array<i64: 1, 4, 32>}, {transform_indices = @transform_1, window_bounds = array<i64: 1, 4, 8>}, {pipeline_mode = #tpu.pipeline_mode<synchronous>, transform_indices = @transform_2, window_bounds = array<i64: 168, 128>}, {pipeline_mode = #tpu.pipeline_mode<synchronous>, transform_indices = @transform_3, window_bounds = array<i64: 128, 1024>}, {pipeline_mode = #tpu.pipeline_mode<synchronous>, transform_indices = @transform_4, window_bounds = array<i64: 8, 128>}, {transform_indices = @transform_5, window_bounds = array<i64: 1, 4, 1>}]} {
    %c0 = arith.constant 0 : index
    %c0_0 = arith.constant 0 : index
    %c0_1 = arith.constant 0 : index
    %0 = vector.load %arg1[%c0, %c0_0, %c0_1] : memref<1x4x32xf32, #tpu.memory_space<vmem>>, vector<1x4x32xf32>
    %1 = vector.shape_cast %0 : vector<1x4x32xf32> to vector<4x32xf32>
    %c0_2 = arith.constant 0 : index
    %c0_3 = arith.constant 0 : index
    %c0_4 = arith.constant 0 : index
    %2 = vector.load %arg2[%c0_2, %c0_3, %c0_4] : memref<1x4x8xf32, #tpu.memory_space<vmem>>, vector<1x4x8xf32>
    %3 = vector.shape_cast %2 : vector<1x4x8xf32> to vector<4x8xf32>
    %c0_5 = arith.constant 0 : index
    %c0_6 = arith.constant 0 : index
    %4 = vector.load %arg5[%c0_5, %c0_6] : memref<8x128xf32, #tpu.memory_space<vmem>>, vector<1x128xf32>
    %c1 = arith.constant 1 : index
    %c0_7 = arith.constant 0 : index
    %5 = vector.load %arg5[%c1, %c0_7] : memref<8x128xf32, #tpu.memory_space<vmem>>, vector<1x128xf32>
    %c2 = arith.constant 2 : index
    %c0_8 = arith.constant 0 : index
    %6 = vector.load %arg5[%c2, %c0_8] : memref<8x128xf32, #tpu.memory_space<vmem>>, vector<1x128xf32>
    %c3 = arith.constant 3 : index
    %c0_9 = arith.constant 0 : index
    %7 = vector.load %arg5[%c3, %c0_9] : memref<8x128xf32, #tpu.memory_space<vmem>>, vector<1x1xf32>
    %c0_10 = arith.constant 0 : index
    %c0_11 = arith.constant 0 : index
    %8 = vector.load %arg3[%c0_10, %c0_11] : memref<168x128xf32, #tpu.memory_space<vmem>>, vector<32x128xf32>
    %c32 = arith.constant 32 : index
    %c0_12 = arith.constant 0 : index
    %9 = vector.load %arg3[%c32, %c0_12] : memref<168x128xf32, #tpu.memory_space<vmem>>, vector<128x128xf32>
    %c160 = arith.constant 160 : index
    %c0_13 = arith.constant 0 : index
    %10 = vector.load %arg3[%c160, %c0_13] : memref<168x128xf32, #tpu.memory_space<vmem>>, vector<8x128xf32>
    %cst = arith.constant dense<0.000000e+00> : vector<4x128xf32>
    %11 = tpu.matmul %1, %8, %cst {dimension_numbers = #tpu.dot_dimension_numbers<[1], [0], [0], [1], [0, 0, 1, 1], [], []>} : vector<4x32xf32>, vector<32x128xf32>, vector<4x128xf32> -> vector<4x128xf32>
    %12 = vector.broadcast %4 : vector<1x128xf32> to vector<4x128xf32>
    %13 = arith.addf %11, %12 : vector<4x128xf32>
    %cst_14 = arith.constant 0.000000e+00 : f32
    %14 = vector.broadcast %cst_14 : f32 to vector<4x128xf32>
    %15 = arith.maximumf %13, %14 : vector<4x128xf32>
    %cst_15 = arith.constant dense<0.000000e+00> : vector<4x128xf32>
    %16 = tpu.matmul %15, %9, %cst_15 {dimension_numbers = #tpu.dot_dimension_numbers<[1], [0], [0], [1], [0, 0, 1, 1], [], []>} : vector<4x128xf32>, vector<128x128xf32>, vector<4x128xf32> -> vector<4x128xf32>
    %cst_16 = arith.constant dense<0.000000e+00> : vector<4x128xf32>
    %17 = tpu.matmul %3, %10, %cst_16 {dimension_numbers = #tpu.dot_dimension_numbers<[1], [0], [0], [1], [0, 0, 1, 1], [], []>} : vector<4x8xf32>, vector<8x128xf32>, vector<4x128xf32> -> vector<4x128xf32>
    %18 = arith.addf %16, %17 : vector<4x128xf32>
    %19 = vector.broadcast %5 : vector<1x128xf32> to vector<4x128xf32>
    %20 = arith.addf %18, %19 : vector<4x128xf32>
    %cst_17 = arith.constant 0.000000e+00 : f32
    %21 = vector.broadcast %cst_17 : f32 to vector<4x128xf32>
    %22 = arith.maximumf %20, %21 : vector<4x128xf32>
    %c0_18 = arith.constant 0 : index
    %c0_19 = arith.constant 0 : index
    %23 = vector.load %arg4[%c0_18, %c0_19] : memref<128x1024xf32, #tpu.memory_space<vmem>>, vector<128x512xf32>
    %cst_20 = arith.constant dense<0.000000e+00> : vector<4x512xf32>
    %24 = tpu.matmul %22, %23, %cst_20 {dimension_numbers = #tpu.dot_dimension_numbers<[1], [0], [0], [1], [0, 0, 1, 1], [], []>} : vector<4x128xf32>, vector<128x512xf32>, vector<4x512xf32> -> vector<4x512xf32>
    %c0_21 = arith.constant 0 : index
    %c512 = arith.constant 512 : index
    %25 = vector.load %arg4[%c0_21, %c512] : memref<128x1024xf32, #tpu.memory_space<vmem>>, vector<128x512xf32>
    %cst_22 = arith.constant 0.000000e+00 : f32
    %26 = vector.broadcast %cst_22 : f32 to vector<1x128xf32>
    %cst_23 = arith.constant 0.000000e+00 : f32
    %27 = vector.broadcast %cst_23 : f32 to vector<1x128xf32>
    %28 = vector.extract_strided_slice %24 {offsets = [0, 0], sizes = [1, 512], strides = [1, 1]} : vector<4x512xf32> to vector<1x512xf32>
    %cst_24 = arith.constant dense<0.000000e+00> : vector<1x512xf32>
    %29 = tpu.matmul %26, %25, %cst_24 {dimension_numbers = #tpu.dot_dimension_numbers<[1], [0], [0], [1], [0, 0, 1, 1], [], []>} : vector<1x128xf32>, vector<128x512xf32>, vector<1x512xf32> -> vector<1x512xf32>
    %30 = arith.addf %28, %29 : vector<1x512xf32>
    %31 = vector.extract_strided_slice %30 {offsets = [0, 0], sizes = [1, 128], strides = [1, 1]} : vector<1x512xf32> to vector<1x128xf32>
    %32 = arith.negf %31 : vector<1x128xf32>
    %33 = math.exp %32 : vector<1x128xf32>
    %cst_25 = arith.constant 1.000000e+00 : f32
    %34 = vector.broadcast %cst_25 : f32 to vector<1x128xf32>
    %35 = arith.addf %34, %33 : vector<1x128xf32>
    %36 = arith.divf %34, %35 : vector<1x128xf32>
    %37 = vector.extract_strided_slice %30 {offsets = [0, 128], sizes = [1, 128], strides = [1, 1]} : vector<1x512xf32> to vector<1x128xf32>
    %38 = arith.negf %37 : vector<1x128xf32>
    %39 = math.exp %38 : vector<1x128xf32>
    %cst_26 = arith.constant 1.000000e+00 : f32
    %40 = vector.broadcast %cst_26 : f32 to vector<1x128xf32>
    %41 = arith.addf %40, %39 : vector<1x128xf32>
    %42 = arith.divf %40, %41 : vector<1x128xf32>
    %43 = vector.extract_strided_slice %30 {offsets = [0, 256], sizes = [1, 128], strides = [1, 1]} : vector<1x512xf32> to vector<1x128xf32>
    %44 = math.tanh %43 : vector<1x128xf32>
    %45 = vector.extract_strided_slice %30 {offsets = [0, 384], sizes = [1, 128], strides = [1, 1]} : vector<1x512xf32> to vector<1x128xf32>
    %46 = arith.negf %45 : vector<1x128xf32>
    %47 = math.exp %46 : vector<1x128xf32>
    %cst_27 = arith.constant 1.000000e+00 : f32
    %48 = vector.broadcast %cst_27 : f32 to vector<1x128xf32>
    %49 = arith.addf %48, %47 : vector<1x128xf32>
    %50 = arith.divf %48, %49 : vector<1x128xf32>
    %51 = arith.mulf %42, %27 : vector<1x128xf32>
    %52 = arith.mulf %36, %44 : vector<1x128xf32>
    %53 = arith.addf %51, %52 : vector<1x128xf32>
    %54 = math.tanh %53 : vector<1x128xf32>
    %55 = arith.mulf %50, %54 : vector<1x128xf32>
    %56 = vector.extract_strided_slice %24 {offsets = [1, 0], sizes = [1, 512], strides = [1, 1]} : vector<4x512xf32> to vector<1x512xf32>
    %cst_28 = arith.constant dense<0.000000e+00> : vector<1x512xf32>
    %57 = tpu.matmul %55, %25, %cst_28 {dimension_numbers = #tpu.dot_dimension_numbers<[1], [0], [0], [1], [0, 0, 1, 1], [], []>} : vector<1x128xf32>, vector<128x512xf32>, vector<1x512xf32> -> vector<1x512xf32>
    %58 = arith.addf %56, %57 : vector<1x512xf32>
    %59 = vector.extract_strided_slice %58 {offsets = [0, 0], sizes = [1, 128], strides = [1, 1]} : vector<1x512xf32> to vector<1x128xf32>
    %60 = arith.negf %59 : vector<1x128xf32>
    %61 = math.exp %60 : vector<1x128xf32>
    %cst_29 = arith.constant 1.000000e+00 : f32
    %62 = vector.broadcast %cst_29 : f32 to vector<1x128xf32>
    %63 = arith.addf %62, %61 : vector<1x128xf32>
    %64 = arith.divf %62, %63 : vector<1x128xf32>
    %65 = vector.extract_strided_slice %58 {offsets = [0, 128], sizes = [1, 128], strides = [1, 1]} : vector<1x512xf32> to vector<1x128xf32>
    %66 = arith.negf %65 : vector<1x128xf32>
    %67 = math.exp %66 : vector<1x128xf32>
    %cst_30 = arith.constant 1.000000e+00 : f32
    %68 = vector.broadcast %cst_30 : f32 to vector<1x128xf32>
    %69 = arith.addf %68, %67 : vector<1x128xf32>
    %70 = arith.divf %68, %69 : vector<1x128xf32>
    %71 = vector.extract_strided_slice %58 {offsets = [0, 256], sizes = [1, 128], strides = [1, 1]} : vector<1x512xf32> to vector<1x128xf32>
    %72 = math.tanh %71 : vector<1x128xf32>
    %73 = vector.extract_strided_slice %58 {offsets = [0, 384], sizes = [1, 128], strides = [1, 1]} : vector<1x512xf32> to vector<1x128xf32>
    %74 = arith.negf %73 : vector<1x128xf32>
    %75 = math.exp %74 : vector<1x128xf32>
    %cst_31 = arith.constant 1.000000e+00 : f32
    %76 = vector.broadcast %cst_31 : f32 to vector<1x128xf32>
    %77 = arith.addf %76, %75 : vector<1x128xf32>
    %78 = arith.divf %76, %77 : vector<1x128xf32>
    %79 = arith.mulf %70, %53 : vector<1x128xf32>
    %80 = arith.mulf %64, %72 : vector<1x128xf32>
    %81 = arith.addf %79, %80 : vector<1x128xf32>
    %82 = math.tanh %81 : vector<1x128xf32>
    %83 = arith.mulf %78, %82 : vector<1x128xf32>
    %84 = vector.extract_strided_slice %24 {offsets = [2, 0], sizes = [1, 512], strides = [1, 1]} : vector<4x512xf32> to vector<1x512xf32>
    %cst_32 = arith.constant dense<0.000000e+00> : vector<1x512xf32>
    %85 = tpu.matmul %83, %25, %cst_32 {dimension_numbers = #tpu.dot_dimension_numbers<[1], [0], [0], [1], [0, 0, 1, 1], [], []>} : vector<1x128xf32>, vector<128x512xf32>, vector<1x512xf32> -> vector<1x512xf32>
    %86 = arith.addf %84, %85 : vector<1x512xf32>
    %87 = vector.extract_strided_slice %86 {offsets = [0, 0], sizes = [1, 128], strides = [1, 1]} : vector<1x512xf32> to vector<1x128xf32>
    %88 = arith.negf %87 : vector<1x128xf32>
    %89 = math.exp %88 : vector<1x128xf32>
    %cst_33 = arith.constant 1.000000e+00 : f32
    %90 = vector.broadcast %cst_33 : f32 to vector<1x128xf32>
    %91 = arith.addf %90, %89 : vector<1x128xf32>
    %92 = arith.divf %90, %91 : vector<1x128xf32>
    %93 = vector.extract_strided_slice %86 {offsets = [0, 128], sizes = [1, 128], strides = [1, 1]} : vector<1x512xf32> to vector<1x128xf32>
    %94 = arith.negf %93 : vector<1x128xf32>
    %95 = math.exp %94 : vector<1x128xf32>
    %cst_34 = arith.constant 1.000000e+00 : f32
    %96 = vector.broadcast %cst_34 : f32 to vector<1x128xf32>
    %97 = arith.addf %96, %95 : vector<1x128xf32>
    %98 = arith.divf %96, %97 : vector<1x128xf32>
    %99 = vector.extract_strided_slice %86 {offsets = [0, 256], sizes = [1, 128], strides = [1, 1]} : vector<1x512xf32> to vector<1x128xf32>
    %100 = math.tanh %99 : vector<1x128xf32>
    %101 = vector.extract_strided_slice %86 {offsets = [0, 384], sizes = [1, 128], strides = [1, 1]} : vector<1x512xf32> to vector<1x128xf32>
    %102 = arith.negf %101 : vector<1x128xf32>
    %103 = math.exp %102 : vector<1x128xf32>
    %cst_35 = arith.constant 1.000000e+00 : f32
    %104 = vector.broadcast %cst_35 : f32 to vector<1x128xf32>
    %105 = arith.addf %104, %103 : vector<1x128xf32>
    %106 = arith.divf %104, %105 : vector<1x128xf32>
    %107 = arith.mulf %98, %81 : vector<1x128xf32>
    %108 = arith.mulf %92, %100 : vector<1x128xf32>
    %109 = arith.addf %107, %108 : vector<1x128xf32>
    %110 = math.tanh %109 : vector<1x128xf32>
    %111 = arith.mulf %106, %110 : vector<1x128xf32>
    %112 = vector.extract_strided_slice %24 {offsets = [3, 0], sizes = [1, 512], strides = [1, 1]} : vector<4x512xf32> to vector<1x512xf32>
    %cst_36 = arith.constant dense<0.000000e+00> : vector<1x512xf32>
    %113 = tpu.matmul %111, %25, %cst_36 {dimension_numbers = #tpu.dot_dimension_numbers<[1], [0], [0], [1], [0, 0, 1, 1], [], []>} : vector<1x128xf32>, vector<128x512xf32>, vector<1x512xf32> -> vector<1x512xf32>
    %114 = arith.addf %112, %113 : vector<1x512xf32>
    %115 = vector.extract_strided_slice %114 {offsets = [0, 0], sizes = [1, 128], strides = [1, 1]} : vector<1x512xf32> to vector<1x128xf32>
    %116 = arith.negf %115 : vector<1x128xf32>
    %117 = math.exp %116 : vector<1x128xf32>
    %cst_37 = arith.constant 1.000000e+00 : f32
    %118 = vector.broadcast %cst_37 : f32 to vector<1x128xf32>
    %119 = arith.addf %118, %117 : vector<1x128xf32>
    %120 = arith.divf %118, %119 : vector<1x128xf32>
    %121 = vector.extract_strided_slice %114 {offsets = [0, 128], sizes = [1, 128], strides = [1, 1]} : vector<1x512xf32> to vector<1x128xf32>
    %122 = arith.negf %121 : vector<1x128xf32>
    %123 = math.exp %122 : vector<1x128xf32>
    %cst_38 = arith.constant 1.000000e+00 : f32
    %124 = vector.broadcast %cst_38 : f32 to vector<1x128xf32>
    %125 = arith.addf %124, %123 : vector<1x128xf32>
    %126 = arith.divf %124, %125 : vector<1x128xf32>
    %127 = vector.extract_strided_slice %114 {offsets = [0, 256], sizes = [1, 128], strides = [1, 1]} : vector<1x512xf32> to vector<1x128xf32>
    %128 = math.tanh %127 : vector<1x128xf32>
    %129 = vector.extract_strided_slice %114 {offsets = [0, 384], sizes = [1, 128], strides = [1, 1]} : vector<1x512xf32> to vector<1x128xf32>
    %130 = arith.negf %129 : vector<1x128xf32>
    %131 = math.exp %130 : vector<1x128xf32>
    %cst_39 = arith.constant 1.000000e+00 : f32
    %132 = vector.broadcast %cst_39 : f32 to vector<1x128xf32>
    %133 = arith.addf %132, %131 : vector<1x128xf32>
    %134 = arith.divf %132, %133 : vector<1x128xf32>
    %135 = arith.mulf %126, %109 : vector<1x128xf32>
    %136 = arith.mulf %120, %128 : vector<1x128xf32>
    %137 = arith.addf %135, %136 : vector<1x128xf32>
    %138 = math.tanh %137 : vector<1x128xf32>
    %139 = arith.mulf %134, %138 : vector<1x128xf32>
    %140 = tpu.concatenate %55, %83, %111, %139 in 0 : vector<1x128xf32>, vector<1x128xf32>, vector<1x128xf32>, vector<1x128xf32> -> vector<4x128xf32>
    %141 = vector.broadcast %6 : vector<1x128xf32> to vector<4x128xf32>
    %142 = arith.mulf %140, %141 : vector<4x128xf32>
    %cst_40 = arith.constant dense<0.000000e+00> : vector<4xf32>
    %143 = vector.multi_reduction <add>, %142, %cst_40 [1] : vector<4x128xf32> to vector<4xf32>
    %144 = vector.shape_cast %143 : vector<4xf32> to vector<4x1xf32>
    %145 = vector.broadcast %7 : vector<1x1xf32> to vector<4x1xf32>
    %146 = arith.addf %144, %145 : vector<4x1xf32>
    %c0_41 = arith.constant 0 : index
    %c0_42 = arith.constant 0 : index
    %c0_43 = arith.constant 0 : index
    %147 = vector.load %arg6[%c0_41, %c0_42, %c0_43] : memref<1x4x1xf32, #tpu.memory_space<vmem>>, vector<1x4x1xf32>
    %148 = vector.shape_cast %147 : vector<1x4x1xf32> to vector<4x1xf32>
    %149 = vector.shape_cast %146 : vector<4x1xf32> to vector<1x4x1xf32>
    tpu.vector_store %arg6[%c0_41, %c0_42, %c0_43], %149 {strides = array<i32>} : memref<1x4x1xf32, #tpu.memory_space<vmem>>, vector<1x4x1xf32>,
    return
  }
  func.func @transform_0(%arg0: i32) -> (i32, i32, i32) {
    %c0_i32 = arith.constant 0 : i32
    %c0_i32_0 = arith.constant 0 : i32
    %c0_i32_1 = arith.constant 0 : i32
    return %arg0, %c0_i32, %c0_i32_0 : i32, i32, i32
  }
  func.func @transform_1(%arg0: i32) -> (i32, i32, i32) {
    %c0_i32 = arith.constant 0 : i32
    %c0_i32_0 = arith.constant 0 : i32
    %c0_i32_1 = arith.constant 0 : i32
    return %arg0, %c0_i32, %c0_i32_0 : i32, i32, i32
  }
  func.func @transform_2(%arg0: i32) -> (i32, i32) {
    %c0_i32 = arith.constant 0 : i32
    %c0_i32_0 = arith.constant 0 : i32
    %c0_i32_1 = arith.constant 0 : i32
    return %c0_i32, %c0_i32_0 : i32, i32
  }
  func.func @transform_3(%arg0: i32) -> (i32, i32) {
    %c0_i32 = arith.constant 0 : i32
    %c0_i32_0 = arith.constant 0 : i32
    %c0_i32_1 = arith.constant 0 : i32
    return %c0_i32, %c0_i32_0 : i32, i32
  }
  func.func @transform_4(%arg0: i32) -> (i32, i32) {
    %c0_i32 = arith.constant 0 : i32
    %c0_i32_0 = arith.constant 0 : i32
    %c0_i32_1 = arith.constant 0 : i32
    return %c0_i32, %c0_i32_0 : i32, i32
  }
  func.func @transform_5(%arg0: i32) -> (i32, i32, i32) {
    %c0_i32 = arith.constant 0 : i32
    %c0_i32_0 = arith.constant 0 : i32
    %c0_i32_1 = arith.constant 0 : i32
    return %arg0, %c0_i32, %c0_i32_0 : i32, i32, i32
  }
}

</mosaic_0001>

<llo_original>
// kernel: _critic_pallas.1
$region0: #{_critic_pallas.1}
  #allocation0 [shape = 'u32[]', space=smem, size = 0x4, offset = 0x4, fixed_abs, tag = 'smem constant byte address 0x4 - core index']
  #allocation1 [shape = 'u32[144,128]{1,0:T(1,128)}', space=vmem, size = 0x12000, scoped, tag = 'internal scratch']
  %s0 = inlined_call_operand.hbm [shape: f32[1,4,32], index: 0, kind: input, shape index: {}]
  %s1 = inlined_call_operand.hbm [shape: f32[1,4,8], index: 1, kind: input, shape index: {}]
  %s2 = inlined_call_operand.hbm [shape: f32[168,128], index: 2, kind: input, shape index: {}]
  %s3 = inlined_call_operand.hbm [shape: f32[128,1024], index: 3, kind: input, shape index: {}]
  %s4 = inlined_call_operand.vmem [shape: f32[8,128], index: 4, kind: input, shape index: {}]
  %s5 = inlined_call_operand.vmem [shape: f32[1,4,1], index: 5, kind: output, shape index: {}]
  %s6 = sld [smem:[#allocation0]]
  $region46: #{_critic_pallas.1} parent=0
    _
  %s8 = ssub.s32 1, %s6
  %s9 = scalar_select 0, %s8, %s6
  $region1: #{_critic_pallas.1} parent=0
    #allocation2 [shape = 'u8[2048]{0}', space=vmem, size = 0x800, scoped, tag = 'input window, operand 0, single buffered']
    #allocation3 [shape = 's32[1]{0}', space=sflag, size = 0x4, scoped, tag = 'scoped memory for _critic_pallas.1']
    #allocation4 [shape = 'u8[2048]{0}', space=vmem, size = 0x800, scoped, tag = 'input window, operand 1, single buffered']
    #allocation5 [shape = 's32[1]{0}', space=sflag, size = 0x4, scoped, tag = 'scoped memory for _critic_pallas.1']
    #allocation6 [shape = 'u8[86016]{0}', space=vmem, size = 0x15000, scoped, tag = 'input window, operand 2, single buffered']
    #allocation7 [shape = 'u8[524288]{0}', space=vmem, size = 0x80000, scoped, tag = 'input window, operand 3, single buffered']
    #allocation8 [shape = 's32[1]{0}', space=sflag, size = 0x4, scoped, tag = 'scoped memory for _critic_pallas.1']
    %10 = vsyncpa [#allocation3], 0
    %11 = vsyncpa [#allocation5], 0
    %12 = vsyncpa [#allocation8], 0
    // Predicated region
    $region2: #{_critic_pallas.1} parent=1 // pred_check
      _
    $region3: #{_critic_pallas.1} parent=1 // pred_check_branch
      %14 = sbr.rel (0) target = $region5
    $region4: #{_critic_pallas.1} parent=1 // pred_region
      %s16 = ssub.s32 64, 64
      %17 = vsyncadd [#allocation3], %s16
      %s19 = sshll.u32 [#allocation2], 4
      %s20 = int_to_ptr.vmem [resolvable:$true] %s19
      %22 = dma.hbm_to_vmem [thread:$0]  %s0, 64, %s20, [#allocation3]
    $region5: #{_critic_pallas.1} parent=1 // pred_fallthru
      _
    // Predicated region
    $region6: #{_critic_pallas.1} parent=1 // pred_check
      _
    $region7: #{_critic_pallas.1} parent=1 // pred_check_branch
      %24 = sbr.rel (0) target = $region9
    $region8: #{_critic_pallas.1} parent=1 // pred_region
      %s26 = ssub.s32 64, 64
      %27 = vsyncadd [#allocation5], %s26
      %s29 = sshll.u32 [#allocation4], 4
      %s30 = int_to_ptr.vmem [resolvable:$true] %s29
      %32 = dma.hbm_to_vmem [thread:$0]  %s1, 64, %s30, [#allocation5]
    $region9: #{_critic_pallas.1} parent=1 // pred_fallthru
      _
    // Predicated region
    $region10: #{_critic_pallas.1} parent=1 // pred_check
      _
    $region11: #{_critic_pallas.1} parent=1 // pred_check_branch
      %34 = sbr.rel (0) target = $region13
    $region12: #{_critic_pallas.1} parent=1 // pred_region
      %s36 = ssub.s32 2688, 2688
      %37 = vsyncadd [#allocation5], %s36
      %s38 = sshll.u32 [#allocation6], 4
      %s39 = int_to_ptr.vmem [resolvable:$true] %s38
      %44 = dma.hbm_to_vmem [thread:$0]  %s2, 2688, %s39, [#allocation5], 128, 128, 8
    $region13: #{_critic_pallas.1} parent=1 // pred_fallthru
      _
    // Predicated region
    $region14: #{_critic_pallas.1} parent=1 // pred_check
      _
    $region15: #{_critic_pallas.1} parent=1 // pred_check_branch
      %46 = sbr.rel (0) target = $region17
    $region16: #{_critic_pallas.1} parent=1 // pred_region
      %s48 = ssub.s32 16384, 16384
      %49 = vsyncadd [#allocation8], %s48
      %s50 = sshll.u32 [#allocation7], 4
      %s51 = int_to_ptr.vmem [resolvable:$true] %s50
      %56 = dma.hbm_to_vmem [thread:$0]  %s3, 16384, %s51, [#allocation8], 1024, 1024, 64
    $region17: #{_critic_pallas.1} parent=1 // pred_fallthru
      _
    // Predicated region
    $region18: #{_critic_pallas.1} parent=1 // pred_check
      _
    $region19: #{_critic_pallas.1} parent=1 // pred_check_branch
      %58 = sbr.rel (0) target = $region21
    $region20: #{_critic_pallas.1} parent=1 // pred_region
      _
    $region21: #{_critic_pallas.1} parent=1 // pred_fallthru
      _
    // Predicated region
    $region22: #{_critic_pallas.1} parent=1 // pred_check
      _
    $region23: #{_critic_pallas.1} parent=1 // pred_check_branch
      %60 = sbr.rel (0) target = $region25
    $region24: #{_critic_pallas.1} parent=1 // pred_region
      %61 = dma.done [#allocation3], 64
    $region25: #{_critic_pallas.1} parent=1 // pred_fallthru
      _
    // Predicated region
    $region26: #{_critic_pallas.1} parent=1 // pred_check
      _
    $region27: #{_critic_pallas.1} parent=1 // pred_check_branch
      %63 = sbr.rel (0) target = $region29
    $region28: #{_critic_pallas.1} parent=1 // pred_region
      %64 = dma.done [#allocation5], 64
    $region29: #{_critic_pallas.1} parent=1 // pred_fallthru
      _
    // Predicated region
    $region30: #{_critic_pallas.1} parent=1 // pred_check
      _
    $region31: #{_critic_pallas.1} parent=1 // pred_check_branch
      %66 = sbr.rel (0) target = $region33
    $region32: #{_critic_pallas.1} parent=1 // pred_region
      %67 = dma.done [#allocation5], 2688
    $region33: #{_critic_pallas.1} parent=1 // pred_fallthru
      _
    // Predicated region
    $region34: #{_critic_pallas.1} parent=1 // pred_check
      _
    $region35: #{_critic_pallas.1} parent=1 // pred_check_branch
      %69 = sbr.rel (0) target = $region37
    $region36: #{_critic_pallas.1} parent=1 // pred_region
      %70 = dma.done [#allocation8], 16384
    $region37: #{_critic_pallas.1} parent=1 // pred_fallthru
      _
    %v71 = vld [vmem:[#allocation2] sm:$0xf]
    %v72 = vld [vmem:[#allocation4] sm:$0xf]
    %v73 = vld [vmem:[%s4] sm:$0x1]
    %v74 = vld [vmem:[%s4 + $0x1] sm:$0x1]
    %v75 = vld [vmem:[%s4 + $0x2] sm:$0x1]
    %v76 = vld [vmem:[%s4 + $0x3] sm:$0x1]
    %v77 = vld [vmem:[#allocation6] sm:$0xff]
    %v78 = vld [vmem:[#allocation6 + $0x8] sm:$0xff]
    %v79 = vld [vmem:[#allocation6 + $0x10] sm:$0xff]
    %v80 = vld [vmem:[#allocation6 + $0x18] sm:$0xff]
    %v81 = vld [vmem:[#allocation6 + $0x20] sm:$0xff]
    %v82 = vld [vmem:[#allocation6 + $0x28] sm:$0xff]
    %v83 = vld [vmem:[#allocation6 + $0x30] sm:$0xff]
    %v84 = vld [vmem:[#allocation6 + $0x38] sm:$0xff]
    %v85 = vld [vmem:[#allocation6 + $0x40] sm:$0xff]
    %v86 = vld [vmem:[#allocation6 + $0x48] sm:$0xff]
    %v87 = vld [vmem:[#allocation6 + $0x50] sm:$0xff]
    %v88 = vld [vmem:[#allocation6 + $0x58] sm:$0xff]
    %v89 = vld [vmem:[#allocation6 + $0x60] sm:$0xff]
    %v90 = vld [vmem:[#allocation6 + $0x68] sm:$0xff]
    %v91 = vld [vmem:[#allocation6 + $0x70] sm:$0xff]
    %v92 = vld [vmem:[#allocation6 + $0x78] sm:$0xff]
    %v93 = vld [vmem:[#allocation6 + $0x80] sm:$0xff]
    %v94 = vld [vmem:[#allocation6 + $0x88] sm:$0xff]
    %v95 = vld [vmem:[#allocation6 + $0x90] sm:$0xff]
    %v96 = vld [vmem:[#allocation6 + $0x98] sm:$0xff]
    %v97 = vld [vmem:[#allocation6 + $0xa0] sm:$0xff]
    %v98 = vlaneseq
    %v99 = vshrl.u32 %v98, 7
    %v100 = vsub.s32 0, %v99
    %v101 = vrot.slane %v73, %v100
    %vm102 = vcmask 261120
    %v104 = vsel %vm102, %v71, 0
    %106 = vmatprep.subr.mxu0 0.0
    %107 = vmatpush1.msra.mxu0 %v77
    %108 = vmatprep.subr.mxu0 0.0
    %109 = vmatpush1.msra.mxu0 %v78
    %110 = vmatprep.subr.mxu0 0.0
    %111 = vmatpush1.msra.mxu0 %v79
    %112 = vmatprep.subr.mxu0 0.0
    %113 = vmatpush1.msra.mxu0 %v80
    %114 = vmatprep.subr.mxu0 0.0
    %115 = vmatpush1.msra.mxu0 0.0
    %116 = vmatprep.subr.mxu0 0.0
    %117 = vmatpush1.msra.mxu0 0.0
    %118 = vmatprep.subr.mxu0 0.0
    %119 = vmatpush1.msra.mxu0 0.0
    %120 = vmatprep.subr.mxu0 0.0
    %121 = vmatpush1.msra.mxu0 0.0
    %122 = vmatprep.subr.mxu0 0.0
    %123 = vmatpush1.msra.mxu0 0.0
    %124 = vmatprep.subr.mxu0 0.0
    %125 = vmatpush1.msra.mxu0 0.0
    %126 = vmatprep.subr.mxu0 0.0
    %127 = vmatpush1.msra.mxu0 0.0
    %128 = vmatprep.subr.mxu0 0.0
    %129 = vmatpush1.msra.mxu0 0.0
    %130 = vmatprep.subr.mxu0 0.0
    %131 = vmatpush1.msra.mxu0 0.0
    %132 = vmatprep.subr.mxu0 0.0
    %133 = vmatpush1.msra.mxu0 0.0
    %134 = vmatprep.subr.mxu0 0.0
    %135 = vmatpush1.msra.mxu0 0.0
    %136 = vmatprep.subr.mxu0 0.0
    %137 = vmatpush1.msra.mxu0 0.0
    %138 = vmatprep.subr.mxu0 0.0
    %139 = vmatpush1.msra.mxu0 0.0
    %140 = vmatprep.subr.mxu0 0.0
    %141 = vmatpush1.msra.mxu0 0.0
    %142 = vmatprep.subr.mxu0 0.0
    %143 = vmatpush1.msra.mxu0 0.0
    %144 = vmatprep.subr.mxu0 0.0
    %145 = vmatpush1.msra.mxu0 0.0
    %146 = vmatprep.subr.mxu0 0.0
    %147 = vmatpush1.msra.mxu0 0.0
    %148 = vmatprep.subr.mxu0 0.0
    %149 = vmatpush1.msra.mxu0 0.0
    %150 = vmatprep.subr.mxu0 0.0
    %151 = vmatpush1.msra.mxu0 0.0
    %152 = vmatprep.subr.mxu0 0.0
    %153 = vmatpush1.msra.mxu0 0.0
    %154 = vmatprep.subr.mxu0 0.0
    %155 = vmatpush1.msra.mxu0 0.0
    %156 = vmatprep.subr.mxu0 0.0
    %157 = vmatpush1.msra.mxu0 0.0
    %158 = vmatprep.subr.mxu0 0.0
    %159 = vmatpush1.msra.mxu0 0.0
    %160 = vmatprep.subr.mxu0 0.0
    %161 = vmatpush1.msra.mxu0 0.0
    %162 = vmatprep.subr.mxu0 0.0
    %163 = vmatpush1.msra.mxu0 0.0
    %164 = vmatprep.subr.mxu0 0.0
    %165 = vmatpush1.msra.mxu0 0.0
    %166 = vmatprep.subr.mxu0 0.0
    %167 = vmatpush1.msra.mxu0 0.0
    %168 = vmatprep.subr.mxu0 0.0
    %169 = vmatpush1.msra.mxu0 0.0
    %170 = vmatprep.mubr.f32.mxu0 0.0
    %171 = vmatmul.mubr.f32.gmra.mrb[0].mxu0 %v104
    %v172 = vpop.f32.mrb[0].mxu0
    %v173 = vadd.f32 %v101, %v172
    %v174 = vpop.f32.mrb[0].mxu0
    %175 = vdwg.mxu0
    %v176 = vmax.f32 %v173, 0.0
    %vm177 = vcmask 64512
    %v179 = vsel %vm177, %v72, 0
    %181 = vmatprep.subr.mxu0 0.0
    %182 = vmatpush1.msra.mxu0 %v97
    %183 = vmatprep.subr.mxu0 0.0
    %184 = vmatpush1.msra.mxu0 0.0
    %185 = vmatprep.subr.mxu0 0.0
    %186 = vmatpush1.msra.mxu0 0.0
    %187 = vmatprep.subr.mxu0 0.0
    %188 = vmatpush1.msra.mxu0 0.0
    %189 = vmatprep.subr.mxu0 0.0
    %190 = vmatpush1.msra.mxu0 0.0
    %191 = vmatprep.subr.mxu0 0.0
    %192 = vmatpush1.msra.mxu0 0.0
    %193 = vmatprep.subr.mxu0 0.0
    %194 = vmatpush1.msra.mxu0 0.0
    %195 = vmatprep.subr.mxu0 0.0
    %196 = vmatpush1.msra.mxu0 0.0
    %197 = vmatprep.subr.mxu0 0.0
    %198 = vmatpush1.msra.mxu0 0.0
    %199 = vmatprep.subr.mxu0 0.0
    %200 = vmatpush1.msra.mxu0 0.0
    %201 = vmatprep.subr.mxu0 0.0
    %202 = vmatpush1.msra.mxu0 0.0
    %203 = vmatprep.subr.mxu0 0.0
    %204 = vmatpush1.msra.mxu0 0.0
    %205 = vmatprep.subr.mxu0 0.0
    %206 = vmatpush1.msra.mxu0 0.0
    %207 = vmatprep.subr.mxu0 0.0
    %208 = vmatpush1.msra.mxu0 0.0
    %209 = vmatprep.subr.mxu0 0.0
    %210 = vmatpush1.msra.mxu0 0.0
    %211 = vmatprep.subr.mxu0 0.0
    %212 = vmatpush1.msra.mxu0 0.0
    %213 = vmatprep.subr.mxu0 0.0
    %214 = vmatpush1.msra.mxu0 0.0
    %215 = vmatprep.subr.mxu0 0.0
    %216 = vmatpush1.msra.mxu0 0.0
    %217 = vmatprep.subr.mxu0 0.0
    %218 = vmatpush1.msra.mxu0 0.0
    %219 = vmatprep.subr.mxu0 0.0
    %220 = vmatpush1.msra.mxu0 0.0
    %221 = vmatprep.subr.mxu0 0.0
    %222 = vmatpush1.msra.mxu0 0.0
    %223 = vmatprep.subr.mxu0 0.0
    %224 = vmatpush1.msra.mxu0 0.0
    %225 = vmatprep.subr.mxu0 0.0
    %226 = vmatpush1.msra.mxu0 0.0
    %227 = vmatprep.subr.mxu0 0.0
    %228 = vmatpush1.msra.mxu0 0.0
    %229 = vmatprep.subr.mxu0 0.0
    %230 = vmatpush1.msra.mxu0 0.0
    %231 = vmatprep.subr.mxu0 0.0
    %232 = vmatpush1.msra.mxu0 0.0
    %233 = vmatprep.subr.mxu0 0.0
    %234 = vmatpush1.msra.mxu0 0.0
    %235 = vmatprep.subr.mxu0 0.0
    %236 = vmatpush1.msra.mxu0 0.0
    %237 = vmatprep.subr.mxu0 0.0
    %238 = vmatpush1.msra.mxu0 0.0
    %239 = vmatprep.subr.mxu0 0.0
    %240 = vmatpush1.msra.mxu0 0.0
    %241 = vmatprep.subr.mxu0 0.0
    %242 = vmatpush1.msra.mxu0 0.0
    %243 = vmatprep.subr.mxu0 0.0
    %244 = vmatpush1.msra.mxu0 0.0
    %245 = vmatprep.mubr.f32.mxu0 0.0
    %246 = vmatmul.mubr.f32.gmra.mrb[0].mxu0 %v179
    %v247 = vpop.f32.mrb[0].mxu0
    %v248 = vadd.f32 0.0, %v247
    %v249 = vpop.f32.mrb[0].mxu0
    %250 = vdwg.mxu0
    %251 = vmatprep.subr.mxu0 0.0
    %252 = vmatpush1.msra.mxu0 %v81
    %253 = vmatprep.subr.mxu0 0.0
    %254 = vmatpush1.msra.mxu0 %v82
    %255 = vmatprep.subr.mxu0 0.0
    %256 = vmatpush1.msra.mxu0 %v83
    %257 = vmatprep.subr.mxu0 0.0
    %258 = vmatpush1.msra.mxu0 %v84
    %259 = vmatprep.subr.mxu0 0.0
    %260 = vmatpush1.msra.mxu0 %v85
    %261 = vmatprep.subr.mxu0 0.0
    %262 = vmatpush1.msra.mxu0 %v86
    %263 = vmatprep.subr.mxu0 0.0
    %264 = vmatpush1.msra.mxu0 %v87
    %265 = vmatprep.subr.mxu0 0.0
    %266 = vmatpush1.msra.mxu0 %v88
    %267 = vmatprep.subr.mxu0 0.0
    %268 = vmatpush1.msra.mxu0 %v89
    %269 = vmatprep.subr.mxu0 0.0
    %270 = vmatpush1.msra.mxu0 %v90
    %271 = vmatprep.subr.mxu0 0.0
    %272 = vmatpush1.msra.mxu0 %v91
    %273 = vmatprep.subr.mxu0 0.0
    %274 = vmatpush1.msra.mxu0 %v92
    %275 = vmatprep.subr.mxu0 0.0
    %276 = vmatpush1.msra.mxu0 %v93
    %277 = vmatprep.subr.mxu0 0.0
    %278 = vmatpush1.msra.mxu0 %v94
    %279 = vmatprep.subr.mxu0 0.0
    %280 = vmatpush1.msra.mxu0 %v95
    %281 = vmatprep.subr.mxu0 0.0
    %282 = vmatpush1.msra.mxu0 %v96
    %283 = vmatprep.subr.mxu0 0.0
    %284 = vmatpush1.msra.mxu0 0.0
    %285 = vmatprep.subr.mxu0 0.0
    %286 = vmatpush1.msra.mxu0 0.0
    %287 = vmatprep.subr.mxu0 0.0
    %288 = vmatpush1.msra.mxu0 0.0
    %289 = vmatprep.subr.mxu0 0.0
    %290 = vmatpush1.msra.mxu0 0.0
    %291 = vmatprep.subr.mxu0 0.0
    %292 = vmatpush1.msra.mxu0 0.0
    %293 = vmatprep.subr.mxu0 0.0
    %294 = vmatpush1.msra.mxu0 0.0
    %295 = vmatprep.subr.mxu0 0.0
    %296 = vmatpush1.msra.mxu0 0.0
    %297 = vmatprep.subr.mxu0 0.0
    %298 = vmatpush1.msra.mxu0 0.0
    %299 = vmatprep.subr.mxu0 0.0
    %300 = vmatpush1.msra.mxu0 0.0
    %301 = vmatprep.subr.mxu0 0.0
    %302 = vmatpush1.msra.mxu0 0.0
    %303 = vmatprep.subr.mxu0 0.0
    %304 = vmatpush1.msra.mxu0 0.0
    %305 = vmatprep.subr.mxu0 0.0
    %306 = vmatpush1.msra.mxu0 0.0
    %307 = vmatprep.subr.mxu0 0.0
    %308 = vmatpush1.msra.mxu0 0.0
    %309 = vmatprep.subr.mxu0 0.0
    %310 = vmatpush1.msra.mxu0 0.0
    %311 = vmatprep.subr.mxu0 0.0
    %312 = vmatpush1.msra.mxu0 0.0
    %313 = vmatprep.subr.mxu0 0.0
    %314 = vmatpush1.msra.mxu0 0.0
    %315 = vmatprep.mubr.f32.mxu0 0.0
    %316 = vmatmul.mubr.f32.gmra.mrb[0].mxu0 %v176
    %v317 = vpop.f32.mrb[0].mxu0
    %v318 = vadd.f32 %v248, %v317
    %v319 = vpop.f32.mrb[0].mxu0
    %320 = vdwg.mxu0
    %v321 = vlaneseq
    %v322 = vshrl.u32 %v321, 7
    %v323 = vsub.s32 0, %v322
    %v324 = vrot.slane %v74, %v323
    %v325 = vadd.f32 %v318, %v324
    %v326 = vmax.f32 %v325, 0.0
    %v327 = vld [vmem:[#allocation7] sm:$0xff]
    %v328 = vld [vmem:[#allocation7 + $0x8] sm:$0xff]
    %v329 = vld [vmem:[#allocation7 + $0x10] sm:$0xff]
    %v330 = vld [vmem:[#allocation7 + $0x18] sm:$0xff]
    %v331 = vld [vmem:[#allocation7 + $0x40] sm:$0xff]
    %v332 = vld [vmem:[#allocation7 + $0x48] sm:$0xff]
    %v333 = vld [vmem:[#allocation7 + $0x50] sm:$0xff]
    %v334 = vld [vmem:[#allocation7 + $0x58] sm:$0xff]
    %v335 = vld [vmem:[#allocation7 + $0x80] sm:$0xff]
    %v336 = vld [vmem:[#allocation7 + $0x88] sm:$0xff]
    %v337 = vld [vmem:[#allocation7 + $0x90] sm:$0xff]
    %v338 = vld [vmem:[#allocation7 + $0x98] sm:$0xff]
    %v339 = vld [vmem:[#allocation7 + $0xc0] sm:$0xff]
    %v340 = vld [vmem:[#allocation7 + $0xc8] sm:$0xff]
    %v341 = vld [vmem:[#allocation7 + $0xd0] sm:$0xff]
    %v342 = vld [vmem:[#allocation7 + $0xd8] sm:$0xff]
    %v343 = vld [vmem:[#allocation7 + $0x100] sm:$0xff]
    %v344 = vld [vmem:[#allocation7 + $0x108] sm:$0xff]
    %v345 = vld [vmem:[#allocation7 + $0x110] sm:$0xff]
    %v346 = vld [vmem:[#allocation7 + $0x118] sm:$0xff]
    %v347 = vld [vmem:[#allocation7 + $0x140] sm:$0xff]
    %v348 = vld [vmem:[#allocation7 + $0x148] sm:$0xff]
    %v349 = vld [vmem:[#allocation7 + $0x150] sm:$0xff]
    %v350 = vld [vmem:[#allocation7 + $0x158] sm:$0xff]
    %v351 = vld [vmem:[#allocation7 + $0x180] sm:$0xff]
    %v352 = vld [vmem:[#allocation7 + $0x188] sm:$0xff]
    %v353 = vld [vmem:[#allocation7 + $0x190] sm:$0xff]
    %v354 = vld [vmem:[#allocation7 + $0x198] sm:$0xff]
    %v355 = vld [vmem:[#allocation7 + $0x1c0] sm:$0xff]
    %v356 = vld [vmem:[#allocation7 + $0x1c8] sm:$0xff]
    %v357 = vld [vmem:[#allocation7 + $0x1d0] sm:$0xff]
    %v358 = vld [vmem:[#allocation7 + $0x1d8] sm:$0xff]
    %v359 = vld [vmem:[#allocation7 + $0x200] sm:$0xff]
    %v360 = vld [vmem:[#allocation7 + $0x208] sm:$0xff]
    %v361 = vld [vmem:[#allocation7 + $0x210] sm:$0xff]
    %v362 = vld [vmem:[#allocation7 + $0x218] sm:$0xff]
    %v363 = vld [vmem:[#allocation7 + $0x240] sm:$0xff]
    %v364 = vld [vmem:[#allocation7 + $0x248] sm:$0xff]
    %v365 = vld [vmem:[#allocation7 + $0x250] sm:$0xff]
    %v366 = vld [vmem:[#allocation7 + $0x258] sm:$0xff]
    %v367 = vld [vmem:[#allocation7 + $0x280] sm:$0xff]
    %v368 = vld [vmem:[#allocation7 + $0x288] sm:$0xff]
    %v369 = vld [vmem:[#allocation7 + $0x290] sm:$0xff]
    %v370 = vld [vmem:[#allocation7 + $0x298] sm:$0xff]
    %v371 = vld [vmem:[#allocation7 + $0x2c0] sm:$0xff]
    %v372 = vld [vmem:[#allocation7 + $0x2c8] sm:$0xff]
    %v373 = vld [vmem:[#allocation7 + $0x2d0] sm:$0xff]
    %v374 = vld [vmem:[#allocation7 + $0x2d8] sm:$0xff]
    %v375 = vld [vmem:[#allocation7 + $0x300] sm:$0xff]
    %v376 = vld [vmem:[#allocation7 + $0x308] sm:$0xff]
    %v377 = vld [vmem:[#allocation7 + $0x310] sm:$0xff]
    %v378 = vld [vmem:[#allocation7 + $0x318] sm:$0xff]
    %v379 = vld [vmem:[#allocation7 + $0x340] sm:$0xff]
    %v380 = vld [vmem:[#allocation7 + $0x348] sm:$0xff]
    %v381 = vld [vmem:[#allocation7 + $0x350] sm:$0xff]
    %v382 = vld [vmem:[#allocation7 + $0x358] sm:$0xff]
    %v383 = vld [vmem:[#allocation7 + $0x380] sm:$0xff]
    %v384 = vld [vmem:[#allocation7 + $0x388] sm:$0xff]
    %v385 = vld [vmem:[#allocation7 + $0x390] sm:$0xff]
    %v386 = vld [vmem:[#allocation7 + $0x398] sm:$0xff]
    %v387 = vld [vmem:[#allocation7 + $0x3c0] sm:$0xff]
    %v388 = vld [vmem:[#allocation7 + $0x3c8] sm:$0xff]
    %v389 = vld [vmem:[#allocation7 + $0x3d0] sm:$0xff]
    %v390 = vld [vmem:[#allocation7 + $0x3d8] sm:$0xff]
    %391 = vmatprep.subr.mxu0 %v328
    %392 = vmatpush1.msra.mxu0 %v327
    %393 = vmatprep.subr.mxu0 %v332
    %394 = vmatpush1.msra.mxu0 %v331
    %395 = vmatprep.subr.mxu0 %v336
    %396 = vmatpush1.msra.mxu0 %v335
    %397 = vmatprep.subr.mxu0 %v340
    %398 = vmatpush1.msra.mxu0 %v339
    %399 = vmatprep.subr.mxu0 %v344
    %400 = vmatpush1.msra.mxu0 %v343
    %401 = vmatprep.subr.mxu0 %v348
    %402 = vmatpush1.msra.mxu0 %v347
    %403 = vmatprep.subr.mxu0 %v352
    %404 = vmatpush1.msra.mxu0 %v351
    %405 = vmatprep.subr.mxu0 %v356
    %406 = vmatpush1.msra.mxu0 %v355
    %407 = vmatprep.subr.mxu0 %v360
    %408 = vmatpush1.msra.mxu0 %v359
    %409 = vmatprep.subr.mxu0 %v364
    %410 = vmatpush1.msra.mxu0 %v363
    %411 = vmatprep.subr.mxu0 %v368
    %412 = vmatpush1.msra.mxu0 %v367
    %413 = vmatprep.subr.mxu0 %v372
    %414 = vmatpush1.msra.mxu0 %v371
    %415 = vmatprep.subr.mxu0 %v376
    %416 = vmatpush1.msra.mxu0 %v375
    %417 = vmatprep.subr.mxu0 %v380
    %418 = vmatpush1.msra.mxu0 %v379
    %419 = vmatprep.subr.mxu0 %v384
    %420 = vmatpush1.msra.mxu0 %v383
    %421 = vmatprep.subr.mxu0 %v388
    %422 = vmatpush1.msra.mxu0 %v387
    %423 = vmatprep.subr.mxu0 0.0
    %424 = vmatpush1.msra.mxu0 0.0
    %425 = vmatprep.subr.mxu0 0.0
    %426 = vmatpush1.msra.mxu0 0.0
    %427 = vmatprep.subr.mxu0 0.0
    %428 = vmatpush1.msra.mxu0 0.0
    %429 = vmatprep.subr.mxu0 0.0
    %430 = vmatpush1.msra.mxu0 0.0
    %431 = vmatprep.subr.mxu0 0.0
    %432 = vmatpush1.msra.mxu0 0.0
    %433 = vmatprep.subr.mxu0 0.0
    %434 = vmatpush1.msra.mxu0 0.0
    %435 = vmatprep.subr.mxu0 0.0
    %436 = vmatpush1.msra.mxu0 0.0
    %437 = vmatprep.subr.mxu0 0.0
    %438 = vmatpush1.msra.mxu0 0.0
    %439 = vmatprep.subr.mxu0 0.0
    %440 = vmatpush1.msra.mxu0 0.0
    %441 = vmatprep.subr.mxu0 0.0
    %442 = vmatpush1.msra.mxu0 0.0
    %443 = vmatprep.subr.mxu0 0.0
    %444 = vmatpush1.msra.mxu0 0.0
    %445 = vmatprep.subr.mxu0 0.0
    %446 = vmatpush1.msra.mxu0 0.0
    %447 = vmatprep.subr.mxu0 0.0
    %448 = vmatpush1.msra.mxu0 0.0
    %449 = vmatprep.subr.mxu0 0.0
    %450 = vmatpush1.msra.mxu0 0.0
    %451 = vmatprep.subr.mxu0 0.0
    %452 = vmatpush1.msra.mxu0 0.0
    %453 = vmatprep.subr.mxu0 0.0
    %454 = vmatpush1.msra.mxu0 0.0
    %455 = vmatprep.mubr.f32.mxu0 0.0
    %456 = vmatmul.mubr.f32.gmra.mrb[0].mxu0 %v326
    %v457 = vpop.f32.mrb[0].mxu0
    %v458 = vadd.f32 0.0, %v457
    %v459 = vpop.f32.mrb[0].mxu0
    %v460 = vadd.f32 0.0, %v459
    %461 = vdwg.mxu0
    %462 = vmatprep.subr.mxu0 %v330
    %463 = vmatpush1.msra.mxu0 %v329
    %464 = vmatprep.subr.mxu0 %v334
    %465 = vmatpush1.msra.mxu0 %v333
    %466 = vmatprep.subr.mxu0 %v338
    %467 = vmatpush1.msra.mxu0 %v337
    %468 = vmatprep.subr.mxu0 %v342
    %469 = vmatpush1.msra.mxu0 %v341
    %470 = vmatprep.subr.mxu0 %v346
    %471 = vmatpush1.msra.mxu0 %v345
    %472 = vmatprep.subr.mxu0 %v350
    %473 = vmatpush1.msra.mxu0 %v349
    %474 = vmatprep.subr.mxu0 %v354
    %475 = vmatpush1.msra.mxu0 %v353
    %476 = vmatprep.subr.mxu0 %v358
    %477 = vmatpush1.msra.mxu0 %v357
    %478 = vmatprep.subr.mxu0 %v362
    %479 = vmatpush1.msra.mxu0 %v361
    %480 = vmatprep.subr.mxu0 %v366
    %481 = vmatpush1.msra.mxu0 %v365
    %482 = vmatprep.subr.mxu0 %v370
    %483 = vmatpush1.msra.mxu0 %v369
    %484 = vmatprep.subr.mxu0 %v374
    %485 = vmatpush1.msra.mxu0 %v373
    %486 = vmatprep.subr.mxu0 %v378
    %487 = vmatpush1.msra.mxu0 %v377
    %488 = vmatprep.subr.mxu0 %v382
    %489 = vmatpush1.msra.mxu0 %v381
    %490 = vmatprep.subr.mxu0 %v386
    %491 = vmatpush1.msra.mxu0 %v385
    %492 = vmatprep.subr.mxu0 %v390
    %493 = vmatpush1.msra.mxu0 %v389
    %494 = vmatprep.subr.mxu0 0.0
    %495 = vmatpush1.msra.mxu0 0.0
    %496 = vmatprep.subr.mxu0 0.0
    %497 = vmatpush1.msra.mxu0 0.0
    %498 = vmatprep.subr.mxu0 0.0
    %499 = vmatpush1.msra.mxu0 0.0
    %500 = vmatprep.subr.mxu0 0.0
    %501 = vmatpush1.msra.mxu0 0.0
    %502 = vmatprep.subr.mxu0 0.0
    %503 = vmatpush1.msra.mxu0 0.0
    %504 = vmatprep.subr.mxu0 0.0
    %505 = vmatpush1.msra.mxu0 0.0
    %506 = vmatprep.subr.mxu0 0.0
    %507 = vmatpush1.msra.mxu0 0.0
    %508 = vmatprep.subr.mxu0 0.0
    %509 = vmatpush1.msra.mxu0 0.0
    %510 = vmatprep.subr.mxu0 0.0
    %511 = vmatpush1.msra.mxu0 0.0
    %512 = vmatprep.subr.mxu0 0.0
    %513 = vmatpush1.msra.mxu0 0.0
    %514 = vmatprep.subr.mxu0 0.0
    %515 = vmatpush1.msra.mxu0 0.0
    %516 = vmatprep.subr.mxu0 0.0
    %517 = vmatpush1.msra.mxu0 0.0
    %518 = vmatprep.subr.mxu0 0.0
    %519 = vmatpush1.msra.mxu0 0.0
    %520 = vmatprep.subr.mxu0 0.0
    %521 = vmatpush1.msra.mxu0 0.0
    %522 = vmatprep.subr.mxu0 0.0
    %523 = vmatpush1.msra.mxu0 0.0
    %524 = vmatprep.subr.mxu0 0.0
    %525 = vmatpush1.msra.mxu0 0.0
    %526 = vmatprep.mubr.f32.mxu0 0.0
    %527 = vmatmul.mubr.f32.gmra.mrb[0].mxu0 %v326
    %v528 = vpop.f32.mrb[0].mxu0
    %v529 = vadd.f32 0.0, %v528
    %v530 = vpop.f32.mrb[0].mxu0
    %v531 = vadd.f32 0.0, %v530
    %532 = vdwg.mxu0
    %v533 = vld [vmem:[#allocation7 + $0x20] sm:$0xff]
    %v534 = vld [vmem:[#allocation7 + $0x28] sm:$0xff]
    %v535 = vld [vmem:[#allocation7 + $0x30] sm:$0xff]
    %v536 = vld [vmem:[#allocation7 + $0x38] sm:$0xff]
    %v537 = vld [vmem:[#allocation7 + $0x60] sm:$0xff]
    %v538 = vld [vmem:[#allocation7 + $0x68] sm:$0xff]
    %v539 = vld [vmem:[#allocation7 + $0x70] sm:$0xff]
    %v540 = vld [vmem:[#allocation7 + $0x78] sm:$0xff]
    %v541 = vld [vmem:[#allocation7 + $0xa0] sm:$0xff]
    %v542 = vld [vmem:[#allocation7 + $0xa8] sm:$0xff]
    %v543 = vld [vmem:[#allocation7 + $0xb0] sm:$0xff]
    %v544 = vld [vmem:[#allocation7 + $0xb8] sm:$0xff]
    %v545 = vld [vmem:[#allocation7 + $0xe0] sm:$0xff]
    %v546 = vld [vmem:[#allocation7 + $0xe8] sm:$0xff]
    %v547 = vld [vmem:[#allocation7 + $0xf0] sm:$0xff]
    %v548 = vld [vmem:[#allocation7 + $0xf8] sm:$0xff]
    %v549 = vld [vmem:[#allocation7 + $0x120] sm:$0xff]
    %v550 = vld [vmem:[#allocation7 + $0x128] sm:$0xff]
    %v551 = vld [vmem:[#allocation7 + $0x130] sm:$0xff]
    %v552 = vld [vmem:[#allocation7 + $0x138] sm:$0xff]
    %v553 = vld [vmem:[#allocation7 + $0x160] sm:$0xff]
    %v554 = vld [vmem:[#allocation7 + $0x168] sm:$0xff]
    %v555 = vld [vmem:[#allocation7 + $0x170] sm:$0xff]
    %v556 = vld [vmem:[#allocation7 + $0x178] sm:$0xff]
    %v557 = vld [vmem:[#allocation7 + $0x1a0] sm:$0xff]
    %v558 = vld [vmem:[#allocation7 + $0x1a8] sm:$0xff]
    %v559 = vld [vmem:[#allocation7 + $0x1b0] sm:$0xff]
    %v560 = vld [vmem:[#allocation7 + $0x1b8] sm:$0xff]
    %v561 = vld [vmem:[#allocation7 + $0x1e0] sm:$0xff]
    %v562 = vld [vmem:[#allocation7 + $0x1e8] sm:$0xff]
    %v563 = vld [vmem:[#allocation7 + $0x1f0] sm:$0xff]
    %v564 = vld [vmem:[#allocation7 + $0x1f8] sm:$0xff]
    %v565 = vld [vmem:[#allocation7 + $0x220] sm:$0xff]
    %v566 = vld [vmem:[#allocation7 + $0x228] sm:$0xff]
    %v567 = vld [vmem:[#allocation7 + $0x230] sm:$0xff]
    %v568 = vld [vmem:[#allocation7 + $0x238] sm:$0xff]
    %v569 = vld [vmem:[#allocation7 + $0x260] sm:$0xff]
    %v570 = vld [vmem:[#allocation7 + $0x268] sm:$0xff]
    %v571 = vld [vmem:[#allocation7 + $0x270] sm:$0xff]
    %v572 = vld [vmem:[#allocation7 + $0x278] sm:$0xff]
    %v573 = vld [vmem:[#allocation7 + $0x2a0] sm:$0xff]
    %v574 = vld [vmem:[#allocation7 + $0x2a8] sm:$0xff]
    %v575 = vld [vmem:[#allocation7 + $0x2b0] sm:$0xff]
    %v576 = vld [vmem:[#allocation7 + $0x2b8] sm:$0xff]
    %v577 = vld [vmem:[#allocation7 + $0x2e0] sm:$0xff]
    %v578 = vld [vmem:[#allocation7 + $0x2e8] sm:$0xff]
    %v579 = vld [vmem:[#allocation7 + $0x2f0] sm:$0xff]
    %v580 = vld [vmem:[#allocation7 + $0x2f8] sm:$0xff]
    %v581 = vld [vmem:[#allocation7 + $0x320] sm:$0xff]
    %v582 = vld [vmem:[#allocation7 + $0x328] sm:$0xff]
    %v583 = vld [vmem:[#allocation7 + $0x330] sm:$0xff]
    %v584 = vld [vmem:[#allocation7 + $0x338] sm:$0xff]
    %v585 = vld [vmem:[#allocation7 + $0x360] sm:$0xff]
    %v586 = vld [vmem:[#allocation7 + $0x368] sm:$0xff]
    %v587 = vld [vmem:[#allocation7 + $0x370] sm:$0xff]
    %v588 = vld [vmem:[#allocation7 + $0x378] sm:$0xff]
    %v589 = vld [vmem:[#allocation7 + $0x3a0] sm:$0xff]
    %v590 = vld [vmem:[#allocation7 + $0x3a8] sm:$0xff]
    %v591 = vld [vmem:[#allocation7 + $0x3b0] sm:$0xff]
    %v592 = vld [vmem:[#allocation7 + $0x3b8] sm:$0xff]
    %v593 = vld [vmem:[#allocation7 + $0x3e0] sm:$0xff]
    %v594 = vld [vmem:[#allocation7 + $0x3e8] sm:$0xff]
    %v595 = vld [vmem:[#allocation7 + $0x3f0] sm:$0xff]
    %v596 = vld [vmem:[#allocation7 + $0x3f8] sm:$0xff]
    %597 = vmatprep.subr.mxu0 %v534
    %598 = vmatpush1.msra.mxu0 %v533
    %599 = vmatprep.subr.mxu0 %v538
    %600 = vmatpush1.msra.mxu0 %v537
    %601 = vmatprep.subr.mxu0 %v542
    %602 = vmatpush1.msra.mxu0 %v541
    %603 = vmatprep.subr.mxu0 %v546
    %604 = vmatpush1.msra.mxu0 %v545
    %605 = vmatprep.subr.mxu0 %v550
    %606 = vmatpush1.msra.mxu0 %v549
    %607 = vmatprep.subr.mxu0 %v554
    %608 = vmatpush1.msra.mxu0 %v553
    %609 = vmatprep.subr.mxu0 %v558
    %610 = vmatpush1.msra.mxu0 %v557
    %611 = vmatprep.subr.mxu0 %v562
    %612 = vmatpush1.msra.mxu0 %v561
    %613 = vmatprep.subr.mxu0 %v566
    %614 = vmatpush1.msra.mxu0 %v565
    %615 = vmatprep.subr.mxu0 %v570
    %616 = vmatpush1.msra.mxu0 %v569
    %617 = vmatprep.subr.mxu0 %v574
    %618 = vmatpush1.msra.mxu0 %v573
    %619 = vmatprep.subr.mxu0 %v578
    %620 = vmatpush1.msra.mxu0 %v577
    %621 = vmatprep.subr.mxu0 %v582
    %622 = vmatpush1.msra.mxu0 %v581
    %623 = vmatprep.subr.mxu0 %v586
    %624 = vmatpush1.msra.mxu0 %v585
    %625 = vmatprep.subr.mxu0 %v590
    %626 = vmatpush1.msra.mxu0 %v589
    %627 = vmatprep.subr.mxu0 %v594
    %628 = vmatpush1.msra.mxu0 %v593
    %629 = vmatprep.subr.mxu0 0.0
    %630 = vmatpush1.msra.mxu0 0.0
    %631 = vmatprep.subr.mxu0 0.0
    %632 = vmatpush1.msra.mxu0 0.0
    %633 = vmatprep.subr.mxu0 0.0
    %634 = vmatpush1.msra.mxu0 0.0
    %635 = vmatprep.subr.mxu0 0.0
    %636 = vmatpush1.msra.mxu0 0.0
    %637 = vmatprep.subr.mxu0 0.0
    %638 = vmatpush1.msra.mxu0 0.0
    %639 = vmatprep.subr.mxu0 0.0
    %640 = vmatpush1.msra.mxu0 0.0
    %641 = vmatprep.subr.mxu0 0.0
    %642 = vmatpush1.msra.mxu0 0.0
    %643 = vmatprep.subr.mxu0 0.0
    %644 = vmatpush1.msra.mxu0 0.0
    %645 = vmatprep.subr.mxu0 0.0
    %646 = vmatpush1.msra.mxu0 0.0
    %647 = vmatprep.subr.mxu0 0.0
    %648 = vmatpush1.msra.mxu0 0.0
    %649 = vmatprep.subr.mxu0 0.0
    %650 = vmatpush1.msra.mxu0 0.0
    %651 = vmatprep.subr.mxu0 0.0
    %652 = vmatpush1.msra.mxu0 0.0
    %653 = vmatprep.subr.mxu0 0.0
    %654 = vmatpush1.msra.mxu0 0.0
    %655 = vmatprep.subr.mxu0 0.0
    %656 = vmatpush1.msra.mxu0 0.0
    %657 = vmatprep.subr.mxu0 0.0
    %658 = vmatpush1.msra.mxu0 0.0
    %659 = vmatprep.subr.mxu0 0.0
    %660 = vmatpush1.msra.mxu0 0.0
    %661 = vmatprep.mubr.f32.mxu0 0.0
    %662 = vmatmul.mubr.f32.gmra.mrb[0].mxu0 0.0
    %v663 = vpop.f32.mrb[0].mxu0
    %v664 = vadd.f32 0.0, %v663
    %v665 = vpop.f32.mrb[0].mxu0
    %v666 = vadd.f32 0.0, %v665
    %667 = vdwg.mxu0
    %668 = vmatprep.subr.mxu0 %v536
    %669 = vmatpush1.msra.mxu0 %v535
    %670 = vmatprep.subr.mxu0 %v540
    %671 = vmatpush1.msra.mxu0 %v539
    %672 = vmatprep.subr.mxu0 %v544
    %673 = vmatpush1.msra.mxu0 %v543
    %674 = vmatprep.subr.mxu0 %v548
    %675 = vmatpush1.msra.mxu0 %v547
    %676 = vmatprep.subr.mxu0 %v552
    %677 = vmatpush1.msra.mxu0 %v551
    %678 = vmatprep.subr.mxu0 %v556
    %679 = vmatpush1.msra.mxu0 %v555
    %680 = vmatprep.subr.mxu0 %v560
    %681 = vmatpush1.msra.mxu0 %v559
    %682 = vmatprep.subr.mxu0 %v564
    %683 = vmatpush1.msra.mxu0 %v563
    %684 = vmatprep.subr.mxu0 %v568
    %685 = vmatpush1.msra.mxu0 %v567
    %686 = vmatprep.subr.mxu0 %v572
    %687 = vmatpush1.msra.mxu0 %v571
    %688 = vmatprep.subr.mxu0 %v576
    %689 = vmatpush1.msra.mxu0 %v575
    %690 = vmatprep.subr.mxu0 %v580
    %691 = vmatpush1.msra.mxu0 %v579
    %692 = vmatprep.subr.mxu0 %v584
    %693 = vmatpush1.msra.mxu0 %v583
    %694 = vmatprep.subr.mxu0 %v588
    %695 = vmatpush1.msra.mxu0 %v587
    %696 = vmatprep.subr.mxu0 %v592
    %697 = vmatpush1.msra.mxu0 %v591
    %698 = vmatprep.subr.mxu0 %v596
    %699 = vmatpush1.msra.mxu0 %v595
    %700 = vmatprep.subr.mxu0 0.0
    %701 = vmatpush1.msra.mxu0 0.0
    %702 = vmatprep.subr.mxu0 0.0
    %703 = vmatpush1.msra.mxu0 0.0
    %704 = vmatprep.subr.mxu0 0.0
    %705 = vmatpush1.msra.mxu0 0.0
    %706 = vmatprep.subr.mxu0 0.0
    %707 = vmatpush1.msra.mxu0 0.0
    %708 = vmatprep.subr.mxu0 0.0
    %709 = vmatpush1.msra.mxu0 0.0
    %710 = vmatprep.subr.mxu0 0.0
    %711 = vmatpush1.msra.mxu0 0.0
    %712 = vmatprep.subr.mxu0 0.0
    %713 = vmatpush1.msra.mxu0 0.0
    %714 = vmatprep.subr.mxu0 0.0
    %715 = vmatpush1.msra.mxu0 0.0
    %716 = vmatprep.subr.mxu0 0.0
    %717 = vmatpush1.msra.mxu0 0.0
    %718 = vmatprep.subr.mxu0 0.0
    %719 = vmatpush1.msra.mxu0 0.0
    %720 = vmatprep.subr.mxu0 0.0
    %721 = vmatpush1.msra.mxu0 0.0
    %722 = vmatprep.subr.mxu0 0.0
    %723 = vmatpush1.msra.mxu0 0.0
    %724 = vmatprep.subr.mxu0 0.0
    %725 = vmatpush1.msra.mxu0 0.0
    %726 = vmatprep.subr.mxu0 0.0
    %727 = vmatpush1.msra.mxu0 0.0
    %728 = vmatprep.subr.mxu0 0.0
    %729 = vmatpush1.msra.mxu0 0.0
    %730 = vmatprep.subr.mxu0 0.0
    %731 = vmatpush1.msra.mxu0 0.0
    %732 = vmatprep.mubr.f32.mxu0 0.0
    %733 = vmatmul.mubr.f32.gmra.mrb[0].mxu0 0.0
    %v734 = vpop.f32.mrb[0].mxu0
    %v735 = vadd.f32 0.0, %v734
    %v736 = vpop.f32.mrb[0].mxu0
    %v737 = vadd.f32 0.0, %v736
    %738 = vdwg.mxu0
    %v739 = vadd.f32 %v458, %v664
    %v740 = vadd.f32 %v460, %v666
    %v741 = vadd.f32 %v529, %v735
    %v742 = vadd.f32 %v531, %v737
    %v743 = vxor.u32 %v739, 2147483648
    %v744 = vmul.f32 %v743, 1.442695
    %v745 = vpow.pop %v744
    %v746 = vadd.f32 %v745, 1.0
    %v747 = vrcp.pop %v746
    %v748 = vmul.f32 1.0, %v747
    %v749 = vxor.u32 %v740, 2147483648
    %v750 = vmul.f32 %v749, 1.442695
    %v751 = vpow.pop %v750
    %v752 = vadd.f32 %v751, 1.0
    %v753 = vrcp.pop %v752
    %v754 = vmul.f32 1.0, %v753
    %v755 = vtanh.pop %v741
    %v756 = vxor.u32 %v742, 2147483648
    %v757 = vmul.f32 %v756, 1.442695
    %v758 = vpow.pop %v757
    %v759 = vadd.f32 %v758, 1.0
    %v760 = vrcp.pop %v759
    %v761 = vmul.f32 1.0, %v760
    %v762 = vmul.f32 %v754, 0.0
    %v763 = vmul.f32 %v748, %v755
    %v764 = vadd.f32 %v762, %v763
    %v765 = vtanh.pop %v764
    %v766 = vmul.f32 %v761, %v765
    %767 = vmatprep.subr.mxu0 %v534
    %768 = vmatpush1.msra.mxu0 %v533
    %769 = vmatprep.subr.mxu0 %v538
    %770 = vmatpush1.msra.mxu0 %v537
    %771 = vmatprep.subr.mxu0 %v542
    %772 = vmatpush1.msra.mxu0 %v541
    %773 = vmatprep.subr.mxu0 %v546
    %774 = vmatpush1.msra.mxu0 %v545
    %775 = vmatprep.subr.mxu0 %v550
    %776 = vmatpush1.msra.mxu0 %v549
    %777 = vmatprep.subr.mxu0 %v554
    %778 = vmatpush1.msra.mxu0 %v553
    %779 = vmatprep.subr.mxu0 %v558
    %780 = vmatpush1.msra.mxu0 %v557
    %781 = vmatprep.subr.mxu0 %v562
    %782 = vmatpush1.msra.mxu0 %v561
    %783 = vmatprep.subr.mxu0 %v566
    %784 = vmatpush1.msra.mxu0 %v565
    %785 = vmatprep.subr.mxu0 %v570
    %786 = vmatpush1.msra.mxu0 %v569
    %787 = vmatprep.subr.mxu0 %v574
    %788 = vmatpush1.msra.mxu0 %v573
    %789 = vmatprep.subr.mxu0 %v578
    %790 = vmatpush1.msra.mxu0 %v577
    %791 = vmatprep.subr.mxu0 %v582
    %792 = vmatpush1.msra.mxu0 %v581
    %793 = vmatprep.subr.mxu0 %v586
    %794 = vmatpush1.msra.mxu0 %v585
    %795 = vmatprep.subr.mxu0 %v590
    %796 = vmatpush1.msra.mxu0 %v589
    %797 = vmatprep.subr.mxu0 %v594
    %798 = vmatpush1.msra.mxu0 %v593
    %799 = vmatprep.subr.mxu0 0.0
    %800 = vmatpush1.msra.mxu0 0.0
    %801 = vmatprep.subr.mxu0 0.0
    %802 = vmatpush1.msra.mxu0 0.0
    %803 = vmatprep.subr.mxu0 0.0
    %804 = vmatpush1.msra.mxu0 0.0
    %805 = vmatprep.subr.mxu0 0.0
    %806 = vmatpush1.msra.mxu0 0.0
    %807 = vmatprep.subr.mxu0 0.0
    %808 = vmatpush1.msra.mxu0 0.0
    %809 = vmatprep.subr.mxu0 0.0
    %810 = vmatpush1.msra.mxu0 0.0
    %811 = vmatprep.subr.mxu0 0.0
    %812 = vmatpush1.msra.mxu0 0.0
    %813 = vmatprep.subr.mxu0 0.0
    %814 = vmatpush1.msra.mxu0 0.0
    %815 = vmatprep.subr.mxu0 0.0
    %816 = vmatpush1.msra.mxu0 0.0
    %817 = vmatprep.subr.mxu0 0.0
    %818 = vmatpush1.msra.mxu0 0.0
    %819 = vmatprep.subr.mxu0 0.0
    %820 = vmatpush1.msra.mxu0 0.0
    %821 = vmatprep.subr.mxu0 0.0
    %822 = vmatpush1.msra.mxu0 0.0
    %823 = vmatprep.subr.mxu0 0.0
    %824 = vmatpush1.msra.mxu0 0.0
    %825 = vmatprep.subr.mxu0 0.0
    %826 = vmatpush1.msra.mxu0 0.0
    %827 = vmatprep.subr.mxu0 0.0
    %828 = vmatpush1.msra.mxu0 0.0
    %829 = vmatprep.subr.mxu0 0.0
    %830 = vmatpush1.msra.mxu0 0.0
    %831 = vmatprep.mubr.f32.mxu0 0.0
    %832 = vmatmul.mubr.f32.gmra.mrb[0].mxu0 %v766
    %v833 = vpop.f32.mrb[0].mxu0
    %v834 = vadd.f32 0.0, %v833
    %v835 = vpop.f32.mrb[0].mxu0
    %v836 = vadd.f32 0.0, %v835
    %837 = vdwg.mxu0
    %838 = vmatprep.subr.mxu0 %v536
    %839 = vmatpush1.msra.mxu0 %v535
    %840 = vmatprep.subr.mxu0 %v540
    %841 = vmatpush1.msra.mxu0 %v539
    %842 = vmatprep.subr.mxu0 %v544
    %843 = vmatpush1.msra.mxu0 %v543
    %844 = vmatprep.subr.mxu0 %v548
    %845 = vmatpush1.msra.mxu0 %v547
    %846 = vmatprep.subr.mxu0 %v552
    %847 = vmatpush1.msra.mxu0 %v551
    %848 = vmatprep.subr.mxu0 %v556
    %849 = vmatpush1.msra.mxu0 %v555
    %850 = vmatprep.subr.mxu0 %v560
    %851 = vmatpush1.msra.mxu0 %v559
    %852 = vmatprep.subr.mxu0 %v564
    %853 = vmatpush1.msra.mxu0 %v563
    %854 = vmatprep.subr.mxu0 %v568
    %855 = vmatpush1.msra.mxu0 %v567
    %856 = vmatprep.subr.mxu0 %v572
    %857 = vmatpush1.msra.mxu0 %v571
    %858 = vmatprep.subr.mxu0 %v576
    %859 = vmatpush1.msra.mxu0 %v575
    %860 = vmatprep.subr.mxu0 %v580
    %861 = vmatpush1.msra.mxu0 %v579
    %862 = vmatprep.subr.mxu0 %v584
    %863 = vmatpush1.msra.mxu0 %v583
    %864 = vmatprep.subr.mxu0 %v588
    %865 = vmatpush1.msra.mxu0 %v587
    %866 = vmatprep.subr.mxu0 %v592
    %867 = vmatpush1.msra.mxu0 %v591
    %868 = vmatprep.subr.mxu0 %v596
    %869 = vmatpush1.msra.mxu0 %v595
    %870 = vmatprep.subr.mxu0 0.0
    %871 = vmatpush1.msra.mxu0 0.0
    %872 = vmatprep.subr.mxu0 0.0
    %873 = vmatpush1.msra.mxu0 0.0
    %874 = vmatprep.subr.mxu0 0.0
    %875 = vmatpush1.msra.mxu0 0.0
    %876 = vmatprep.subr.mxu0 0.0
    %877 = vmatpush1.msra.mxu0 0.0
    %878 = vmatprep.subr.mxu0 0.0
    %879 = vmatpush1.msra.mxu0 0.0
    %880 = vmatprep.subr.mxu0 0.0
    %881 = vmatpush1.msra.mxu0 0.0
    %882 = vmatprep.subr.mxu0 0.0
    %883 = vmatpush1.msra.mxu0 0.0
    %884 = vmatprep.subr.mxu0 0.0
    %885 = vmatpush1.msra.mxu0 0.0
    %886 = vmatprep.subr.mxu0 0.0
    %887 = vmatpush1.msra.mxu0 0.0
    %888 = vmatprep.subr.mxu0 0.0
    %889 = vmatpush1.msra.mxu0 0.0
    %890 = vmatprep.subr.mxu0 0.0
    %891 = vmatpush1.msra.mxu0 0.0
    %892 = vmatprep.subr.mxu0 0.0
    %893 = vmatpush1.msra.mxu0 0.0
    %894 = vmatprep.subr.mxu0 0.0
    %895 = vmatpush1.msra.mxu0 0.0
    %896 = vmatprep.subr.mxu0 0.0
    %897 = vmatpush1.msra.mxu0 0.0
    %898 = vmatprep.subr.mxu0 0.0
    %899 = vmatpush1.msra.mxu0 0.0
    %900 = vmatprep.subr.mxu0 0.0
    %901 = vmatpush1.msra.mxu0 0.0
    %902 = vmatprep.mubr.f32.mxu0 0.0
    %903 = vmatmul.mubr.f32.gmra.mrb[0].mxu0 %v766
    %v904 = vpop.f32.mrb[0].mxu0
    %v905 = vadd.f32 0.0, %v904
    %v906 = vpop.f32.mrb[0].mxu0
    %v907 = vadd.f32 0.0, %v906
    %908 = vdwg.mxu0
    %v913 = vrot.slane %v834, 7
    %v914 = vrot.slane %v836, 7
    %v915 = vrot.slane %v905, 7
    %v916 = vrot.slane %v907, 7
    %v921 = vadd.f32 %v458, %v913
    %v922 = vadd.f32 %v460, %v914
    %v923 = vadd.f32 %v529, %v915
    %v924 = vadd.f32 %v531, %v916
    %v925 = vxor.u32 %v921, 2147483648
    %v926 = vmul.f32 %v925, 1.442695
    %v927 = vpow.pop %v926
    %v928 = vadd.f32 %v927, 1.0
    %v929 = vrcp.pop %v928
    %v930 = vmul.f32 1.0, %v929
    %v931 = vxor.u32 %v922, 2147483648
    %v932 = vmul.f32 %v931, 1.442695
    %v933 = vpow.pop %v932
    %v934 = vadd.f32 %v933, 1.0
    %v935 = vrcp.pop %v934
    %v936 = vmul.f32 1.0, %v935
    %v937 = vtanh.pop %v923
    %v938 = vxor.u32 %v924, 2147483648
    %v939 = vmul.f32 %v938, 1.442695
    %v940 = vpow.pop %v939
    %v941 = vadd.f32 %v940, 1.0
    %v942 = vrcp.pop %v941
    %v943 = vmul.f32 1.0, %v942
    %v945 = vrot.slane %v764, 7
    %v947 = vmul.f32 %v936, %v945
    %v948 = vmul.f32 %v930, %v937
    %v949 = vadd.f32 %v947, %v948
    %v950 = vtanh.pop %v949
    %v951 = vmul.f32 %v943, %v950
    %v953 = vrot.slane %v951, 1
    %955 = vmatprep.subr.mxu0 %v534
    %956 = vmatpush1.msra.mxu0 %v533
    %957 = vmatprep.subr.mxu0 %v538
    %958 = vmatpush1.msra.mxu0 %v537
    %959 = vmatprep.subr.mxu0 %v542
    %960 = vmatpush1.msra.mxu0 %v541
    %961 = vmatprep.subr.mxu0 %v546
    %962 = vmatpush1.msra.mxu0 %v545
    %963 = vmatprep.subr.mxu0 %v550
    %964 = vmatpush1.msra.mxu0 %v549
    %965 = vmatprep.subr.mxu0 %v554
    %966 = vmatpush1.msra.mxu0 %v553
    %967 = vmatprep.subr.mxu0 %v558
    %968 = vmatpush1.msra.mxu0 %v557
    %969 = vmatprep.subr.mxu0 %v562
    %970 = vmatpush1.msra.mxu0 %v561
    %971 = vmatprep.subr.mxu0 %v566
    %972 = vmatpush1.msra.mxu0 %v565
    %973 = vmatprep.subr.mxu0 %v570
    %974 = vmatpush1.msra.mxu0 %v569
    %975 = vmatprep.subr.mxu0 %v574
    %976 = vmatpush1.msra.mxu0 %v573
    %977 = vmatprep.subr.mxu0 %v578
    %978 = vmatpush1.msra.mxu0 %v577
    %979 = vmatprep.subr.mxu0 %v582
    %980 = vmatpush1.msra.mxu0 %v581
    %981 = vmatprep.subr.mxu0 %v586
    %982 = vmatpush1.msra.mxu0 %v585
    %983 = vmatprep.subr.mxu0 %v590
    %984 = vmatpush1.msra.mxu0 %v589
    %985 = vmatprep.subr.mxu0 %v594
    %986 = vmatpush1.msra.mxu0 %v593
    %987 = vmatprep.subr.mxu0 0.0
    %988 = vmatpush1.msra.mxu0 0.0
    %989 = vmatprep.subr.mxu0 0.0
    %990 = vmatpush1.msra.mxu0 0.0
    %991 = vmatprep.subr.mxu0 0.0
    %992 = vmatpush1.msra.mxu0 0.0
    %993 = vmatprep.subr.mxu0 0.0
    %994 = vmatpush1.msra.mxu0 0.0
    %995 = vmatprep.subr.mxu0 0.0
    %996 = vmatpush1.msra.mxu0 0.0
    %997 = vmatprep.subr.mxu0 0.0
    %998 = vmatpush1.msra.mxu0 0.0
    %999 = vmatprep.subr.mxu0 0.0
    %1000 = vmatpush1.msra.mxu0 0.0
    %1001 = vmatprep.subr.mxu0 0.0
    %1002 = vmatpush1.msra.mxu0 0.0
    %1003 = vmatprep.subr.mxu0 0.0
    %1004 = vmatpush1.msra.mxu0 0.0
    %1005 = vmatprep.subr.mxu0 0.0
    %1006 = vmatpush1.msra.mxu0 0.0
    %1007 = vmatprep.subr.mxu0 0.0
    %1008 = vmatpush1.msra.mxu0 0.0
    %1009 = vmatprep.subr.mxu0 0.0
    %1010 = vmatpush1.msra.mxu0 0.0
    %1011 = vmatprep.subr.mxu0 0.0
    %1012 = vmatpush1.msra.mxu0 0.0
    %1013 = vmatprep.subr.mxu0 0.0
    %1014 = vmatpush1.msra.mxu0 0.0
    %1015 = vmatprep.subr.mxu0 0.0
    %1016 = vmatpush1.msra.mxu0 0.0
    %1017 = vmatprep.subr.mxu0 0.0
    %1018 = vmatpush1.msra.mxu0 0.0
    %1019 = vmatprep.mubr.f32.mxu0 0.0
    %1020 = vmatmul.mubr.f32.gmra.mrb[0].mxu0 %v953
    %v1021 = vpop.f32.mrb[0].mxu0
    %v1022 = vadd.f32 0.0, %v1021
    %v1023 = vpop.f32.mrb[0].mxu0
    %v1024 = vadd.f32 0.0, %v1023
    %1025 = vdwg.mxu0
    %1026 = vmatprep.subr.mxu0 %v536
    %1027 = vmatpush1.msra.mxu0 %v535
    %1028 = vmatprep.subr.mxu0 %v540
    %1029 = vmatpush1.msra.mxu0 %v539
    %1030 = vmatprep.subr.mxu0 %v544
    %1031 = vmatpush1.msra.mxu0 %v543
    %1032 = vmatprep.subr.mxu0 %v548
    %1033 = vmatpush1.msra.mxu0 %v547
    %1034 = vmatprep.subr.mxu0 %v552
    %1035 = vmatpush1.msra.mxu0 %v551
    %1036 = vmatprep.subr.mxu0 %v556
    %1037 = vmatpush1.msra.mxu0 %v555
    %1038 = vmatprep.subr.mxu0 %v560
    %1039 = vmatpush1.msra.mxu0 %v559
    %1040 = vmatprep.subr.mxu0 %v564
    %1041 = vmatpush1.msra.mxu0 %v563
    %1042 = vmatprep.subr.mxu0 %v568
    %1043 = vmatpush1.msra.mxu0 %v567
    %1044 = vmatprep.subr.mxu0 %v572
    %1045 = vmatpush1.msra.mxu0 %v571
    %1046 = vmatprep.subr.mxu0 %v576
    %1047 = vmatpush1.msra.mxu0 %v575
    %1048 = vmatprep.subr.mxu0 %v580
    %1049 = vmatpush1.msra.mxu0 %v579
    %1050 = vmatprep.subr.mxu0 %v584
    %1051 = vmatpush1.msra.mxu0 %v583
    %1052 = vmatprep.subr.mxu0 %v588
    %1053 = vmatpush1.msra.mxu0 %v587
    %1054 = vmatprep.subr.mxu0 %v592
    %1055 = vmatpush1.msra.mxu0 %v591
    %1056 = vmatprep.subr.mxu0 %v596
    %1057 = vmatpush1.msra.mxu0 %v595
    %1058 = vmatprep.subr.mxu0 0.0
    %1059 = vmatpush1.msra.mxu0 0.0
    %1060 = vmatprep.subr.mxu0 0.0
    %1061 = vmatpush1.msra.mxu0 0.0
    %1062 = vmatprep.subr.mxu0 0.0
    %1063 = vmatpush1.msra.mxu0 0.0
    %1064 = vmatprep.subr.mxu0 0.0
    %1065 = vmatpush1.msra.mxu0 0.0
    %1066 = vmatprep.subr.mxu0 0.0
    %1067 = vmatpush1.msra.mxu0 0.0
    %1068 = vmatprep.subr.mxu0 0.0
    %1069 = vmatpush1.msra.mxu0 0.0
    %1070 = vmatprep.subr.mxu0 0.0
    %1071 = vmatpush1.msra.mxu0 0.0
    %1072 = vmatprep.subr.mxu0 0.0
    %1073 = vmatpush1.msra.mxu0 0.0
    %1074 = vmatprep.subr.mxu0 0.0
    %1075 = vmatpush1.msra.mxu0 0.0
    %1076 = vmatprep.subr.mxu0 0.0
    %1077 = vmatpush1.msra.mxu0 0.0
    %1078 = vmatprep.subr.mxu0 0.0
    %1079 = vmatpush1.msra.mxu0 0.0
    %1080 = vmatprep.subr.mxu0 0.0
    %1081 = vmatpush1.msra.mxu0 0.0
    %1082 = vmatprep.subr.mxu0 0.0
    %1083 = vmatpush1.msra.mxu0 0.0
    %1084 = vmatprep.subr.mxu0 0.0
    %1085 = vmatpush1.msra.mxu0 0.0
    %1086 = vmatprep.subr.mxu0 0.0
    %1087 = vmatpush1.msra.mxu0 0.0
    %1088 = vmatprep.subr.mxu0 0.0
    %1089 = vmatpush1.msra.mxu0 0.0
    %1090 = vmatprep.mubr.f32.mxu0 0.0
    %1091 = vmatmul.mubr.f32.gmra.mrb[0].mxu0 %v953
    %v1092 = vpop.f32.mrb[0].mxu0
    %v1093 = vadd.f32 0.0, %v1092
    %v1094 = vpop.f32.mrb[0].mxu0
    %v1095 = vadd.f32 0.0, %v1094
    %1096 = vdwg.mxu0
    %v1101 = vrot.slane %v1022, 6
    %v1102 = vrot.slane %v1024, 6
    %v1103 = vrot.slane %v1093, 6
    %v1104 = vrot.slane %v1095, 6
    %v1109 = vadd.f32 %v458, %v1101
    %v1110 = vadd.f32 %v460, %v1102
    %v1111 = vadd.f32 %v529, %v1103
    %v1112 = vadd.f32 %v531, %v1104
    %v1113 = vxor.u32 %v1109, 2147483648
    %v1114 = vmul.f32 %v1113, 1.442695
    %v1115 = vpow.pop %v1114
    %v1116 = vadd.f32 %v1115, 1.0
    %v1117 = vrcp.pop %v1116
    %v1118 = vmul.f32 1.0, %v1117
    %v1119 = vxor.u32 %v1110, 2147483648
    %v1120 = vmul.f32 %v1119, 1.442695
    %v1121 = vpow.pop %v1120
    %v1122 = vadd.f32 %v1121, 1.0
    %v1123 = vrcp.pop %v1122
    %v1124 = vmul.f32 1.0, %v1123
    %v1125 = vtanh.pop %v1111
    %v1126 = vxor.u32 %v1112, 2147483648
    %v1127 = vmul.f32 %v1126, 1.442695
    %v1128 = vpow.pop %v1127
    %v1129 = vadd.f32 %v1128, 1.0
    %v1130 = vrcp.pop %v1129
    %v1131 = vmul.f32 1.0, %v1130
    %v1133 = vrot.slane %v949, 7
    %v1135 = vmul.f32 %v1124, %v1133
    %v1136 = vmul.f32 %v1118, %v1125
    %v1137 = vadd.f32 %v1135, %v1136
    %v1138 = vtanh.pop %v1137
    %v1139 = vmul.f32 %v1131, %v1138
    %v1141 = vrot.slane %v1139, 2
    %1143 = vmatprep.subr.mxu0 %v534
    %1144 = vmatpush1.msra.mxu0 %v533
    %1145 = vmatprep.subr.mxu0 %v538
    %1146 = vmatpush1.msra.mxu0 %v537
    %1147 = vmatprep.subr.mxu0 %v542
    %1148 = vmatpush1.msra.mxu0 %v541
    %1149 = vmatprep.subr.mxu0 %v546
    %1150 = vmatpush1.msra.mxu0 %v545
    %1151 = vmatprep.subr.mxu0 %v550
    %1152 = vmatpush1.msra.mxu0 %v549
    %1153 = vmatprep.subr.mxu0 %v554
    %1154 = vmatpush1.msra.mxu0 %v553
    %1155 = vmatprep.subr.mxu0 %v558
    %1156 = vmatpush1.msra.mxu0 %v557
    %1157 = vmatprep.subr.mxu0 %v562
    %1158 = vmatpush1.msra.mxu0 %v561
    %1159 = vmatprep.subr.mxu0 %v566
    %1160 = vmatpush1.msra.mxu0 %v565
    %1161 = vmatprep.subr.mxu0 %v570
    %1162 = vmatpush1.msra.mxu0 %v569
    %1163 = vmatprep.subr.mxu0 %v574
    %1164 = vmatpush1.msra.mxu0 %v573
    %1165 = vmatprep.subr.mxu0 %v578
    %1166 = vmatpush1.msra.mxu0 %v577
    %1167 = vmatprep.subr.mxu0 %v582
    %1168 = vmatpush1.msra.mxu0 %v581
    %1169 = vmatprep.subr.mxu0 %v586
    %1170 = vmatpush1.msra.mxu0 %v585
    %1171 = vmatprep.subr.mxu0 %v590
    %1172 = vmatpush1.msra.mxu0 %v589
    %1173 = vmatprep.subr.mxu0 %v594
    %1174 = vmatpush1.msra.mxu0 %v593
    %1175 = vmatprep.subr.mxu0 0.0
    %1176 = vmatpush1.msra.mxu0 0.0
    %1177 = vmatprep.subr.mxu0 0.0
    %1178 = vmatpush1.msra.mxu0 0.0
    %1179 = vmatprep.subr.mxu0 0.0
    %1180 = vmatpush1.msra.mxu0 0.0
    %1181 = vmatprep.subr.mxu0 0.0
    %1182 = vmatpush1.msra.mxu0 0.0
    %1183 = vmatprep.subr.mxu0 0.0
    %1184 = vmatpush1.msra.mxu0 0.0
    %1185 = vmatprep.subr.mxu0 0.0
    %1186 = vmatpush1.msra.mxu0 0.0
    %1187 = vmatprep.subr.mxu0 0.0
    %1188 = vmatpush1.msra.mxu0 0.0
    %1189 = vmatprep.subr.mxu0 0.0
    %1190 = vmatpush1.msra.mxu0 0.0
    %1191 = vmatprep.subr.mxu0 0.0
    %1192 = vmatpush1.msra.mxu0 0.0
    %1193 = vmatprep.subr.mxu0 0.0
    %1194 = vmatpush1.msra.mxu0 0.0
    %1195 = vmatprep.subr.mxu0 0.0
    %1196 = vmatpush1.msra.mxu0 0.0
    %1197 = vmatprep.subr.mxu0 0.0
    %1198 = vmatpush1.msra.mxu0 0.0
    %1199 = vmatprep.subr.mxu0 0.0
    %1200 = vmatpush1.msra.mxu0 0.0
    %1201 = vmatprep.subr.mxu0 0.0
    %1202 = vmatpush1.msra.mxu0 0.0
    %1203 = vmatprep.subr.mxu0 0.0
    %1204 = vmatpush1.msra.mxu0 0.0
    %1205 = vmatprep.subr.mxu0 0.0
    %1206 = vmatpush1.msra.mxu0 0.0
    %1207 = vmatprep.mubr.f32.mxu0 0.0
    %1208 = vmatmul.mubr.f32.gmra.mrb[0].mxu0 %v1141
    %v1209 = vpop.f32.mrb[0].mxu0
    %v1210 = vadd.f32 0.0, %v1209
    %v1211 = vpop.f32.mrb[0].mxu0
    %v1212 = vadd.f32 0.0, %v1211
    %1213 = vdwg.mxu0
    %1214 = vmatprep.subr.mxu0 %v536
    %1215 = vmatpush1.msra.mxu0 %v535
    %1216 = vmatprep.subr.mxu0 %v540
    %1217 = vmatpush1.msra.mxu0 %v539
    %1218 = vmatprep.subr.mxu0 %v544
    %1219 = vmatpush1.msra.mxu0 %v543
    %1220 = vmatprep.subr.mxu0 %v548
    %1221 = vmatpush1.msra.mxu0 %v547
    %1222 = vmatprep.subr.mxu0 %v552
    %1223 = vmatpush1.msra.mxu0 %v551
    %1224 = vmatprep.subr.mxu0 %v556
    %1225 = vmatpush1.msra.mxu0 %v555
    %1226 = vmatprep.subr.mxu0 %v560
    %1227 = vmatpush1.msra.mxu0 %v559
    %1228 = vmatprep.subr.mxu0 %v564
    %1229 = vmatpush1.msra.mxu0 %v563
    %1230 = vmatprep.subr.mxu0 %v568
    %1231 = vmatpush1.msra.mxu0 %v567
    %1232 = vmatprep.subr.mxu0 %v572
    %1233 = vmatpush1.msra.mxu0 %v571
    %1234 = vmatprep.subr.mxu0 %v576
    %1235 = vmatpush1.msra.mxu0 %v575
    %1236 = vmatprep.subr.mxu0 %v580
    %1237 = vmatpush1.msra.mxu0 %v579
    %1238 = vmatprep.subr.mxu0 %v584
    %1239 = vmatpush1.msra.mxu0 %v583
    %1240 = vmatprep.subr.mxu0 %v588
    %1241 = vmatpush1.msra.mxu0 %v587
    %1242 = vmatprep.subr.mxu0 %v592
    %1243 = vmatpush1.msra.mxu0 %v591
    %1244 = vmatprep.subr.mxu0 %v596
    %1245 = vmatpush1.msra.mxu0 %v595
    %1246 = vmatprep.subr.mxu0 0.0
    %1247 = vmatpush1.msra.mxu0 0.0
    %1248 = vmatprep.subr.mxu0 0.0
    %1249 = vmatpush1.msra.mxu0 0.0
    %1250 = vmatprep.subr.mxu0 0.0
    %1251 = vmatpush1.msra.mxu0 0.0
    %1252 = vmatprep.subr.mxu0 0.0
    %1253 = vmatpush1.msra.mxu0 0.0
    %1254 = vmatprep.subr.mxu0 0.0
    %1255 = vmatpush1.msra.mxu0 0.0
    %1256 = vmatprep.subr.mxu0 0.0
    %1257 = vmatpush1.msra.mxu0 0.0
    %1258 = vmatprep.subr.mxu0 0.0
    %1259 = vmatpush1.msra.mxu0 0.0
    %1260 = vmatprep.subr.mxu0 0.0
    %1261 = vmatpush1.msra.mxu0 0.0
    %1262 = vmatprep.subr.mxu0 0.0
    %1263 = vmatpush1.msra.mxu0 0.0
    %1264 = vmatprep.subr.mxu0 0.0
    %1265 = vmatpush1.msra.mxu0 0.0
    %1266 = vmatprep.subr.mxu0 0.0
    %1267 = vmatpush1.msra.mxu0 0.0
    %1268 = vmatprep.subr.mxu0 0.0
    %1269 = vmatpush1.msra.mxu0 0.0
    %1270 = vmatprep.subr.mxu0 0.0
    %1271 = vmatpush1.msra.mxu0 0.0
    %1272 = vmatprep.subr.mxu0 0.0
    %1273 = vmatpush1.msra.mxu0 0.0
    %1274 = vmatprep.subr.mxu0 0.0
    %1275 = vmatpush1.msra.mxu0 0.0
    %1276 = vmatprep.subr.mxu0 0.0
    %1277 = vmatpush1.msra.mxu0 0.0
    %1278 = vmatprep.mubr.f32.mxu0 0.0
    %1279 = vmatmul.mubr.f32.gmra.mrb[0].mxu0 %v1141
    %v1280 = vpop.f32.mrb[0].mxu0
    %v1281 = vadd.f32 0.0, %v1280
    %v1282 = vpop.f32.mrb[0].mxu0
    %v1283 = vadd.f32 0.0, %v1282
    %1284 = vdwg.mxu0
    %v1289 = vrot.slane %v1210, 5
    %v1290 = vrot.slane %v1212, 5
    %v1291 = vrot.slane %v1281, 5
    %v1292 = vrot.slane %v1283, 5
    %v1297 = vadd.f32 %v458, %v1289
    %v1298 = vadd.f32 %v460, %v1290
    %v1299 = vadd.f32 %v529, %v1291
    %v1300 = vadd.f32 %v531, %v1292
    %v1301 = vxor.u32 %v1297, 2147483648
    %v1302 = vmul.f32 %v1301, 1.442695
    %v1303 = vpow.pop %v1302
    %v1304 = vadd.f32 %v1303, 1.0
    %v1305 = vrcp.pop %v1304
    %v1306 = vmul.f32 1.0, %v1305
    %v1307 = vxor.u32 %v1298, 2147483648
    %v1308 = vmul.f32 %v1307, 1.442695
    %v1309 = vpow.pop %v1308
    %v1310 = vadd.f32 %v1309, 1.0
    %v1311 = vrcp.pop %v1310
    %v1312 = vmul.f32 1.0, %v1311
    %v1313 = vtanh.pop %v1299
    %v1314 = vxor.u32 %v1300, 2147483648
    %v1315 = vmul.f32 %v1314, 1.442695
    %v1316 = vpow.pop %v1315
    %v1317 = vadd.f32 %v1316, 1.0
    %v1318 = vrcp.pop %v1317
    %v1319 = vmul.f32 1.0, %v1318
    %v1321 = vrot.slane %v1137, 7
    %v1323 = vmul.f32 %v1312, %v1321
    %v1324 = vmul.f32 %v1306, %v1313
    %v1325 = vadd.f32 %v1323, %v1324
    %v1326 = vtanh.pop %v1325
    %v1327 = vmul.f32 %v1319, %v1326
    %vm1328 = vcmask 1040384
    %v1329 = vsel %vm1328, %v766, %v951
    %vm1330 = vcmask 1041408
    %v1331 = vsel %vm1330, %v1329, %v1139
    %vm1332 = vcmask 1042432
    %v1333 = vsel %vm1332, %v1331, %v1327
    %v1334 = vlaneseq
    %v1335 = vshrl.u32 %v1334, 7
    %v1336 = vsub.s32 0, %v1335
    %v1337 = vrot.slane %v75, %v1336
    %v1338 = vmul.f32 %v1333, %v1337
    %vm1339 = vcmask 1043456
    %v1340 = vsel %vm1339, %v1338, 0.0
    %1341 = vadd.xlane.f32.xlu0 %v1340
    %v1342 = vpop.xlane.xlu0 %1341
    %v1343 = vlaneseq
    %v1344 = vshrl.u32 %v1343, 7
    %v1345 = vsub.s32 0, %v1344
    %v1346 = vrot.slane %v76, %v1345
    %v1347 = vadd.f32 %v1342, %v1346
    %vm1348 = vcmask 3072
    %1349 = vst.msk [vmem:[%s5] sm:$0xf] %vm1348, %v1347
    // Predicated region
    $region38: #{_critic_pallas.1} parent=1 // pred_check
      _
    $region39: #{_critic_pallas.1} parent=1 // pred_check_branch
      %1351 = sbr.rel (0) target = $region41
    $region40: #{_critic_pallas.1} parent=1 // pred_region
      _
    $region41: #{_critic_pallas.1} parent=1 // pred_fallthru
      _
    // Predicated region
    $region42: #{_critic_pallas.1} parent=1 // pred_check
      _
    $region43: #{_critic_pallas.1} parent=1 // pred_check_branch
      %1353 = sbr.rel (0) target = $region45
    $region44: #{_critic_pallas.1} parent=1 // pred_region
      _
    $region45: #{_critic_pallas.1} parent=1 // pred_fallthru
      _
    %1354 = vsyncpa [#allocation3], 1
    %1355 = vsyncpa [#allocation5], 1
    %1356 = vsyncpa [#allocation8], 1

</llo_original>
